<compile_context>
chip_gen: v7x
topology: tpu7x:2x2x1
jax: 0.10.0
libtpu: 0.0.40
codegen_flags: <defaults>
</compile_context>

<pallas_src>
import jax
import jax.numpy as jnp
from jax import lax
from jax.experimental import pallas as pl
from jax.experimental.pallas import tpu as pltpu

EPS = 1e-5


def _conv3x3(x4d_bf, wfused_ref, zrow, mask_l, mask_r):
    """3x3 'same' conv: one MXU matmul with ky fused into K and kx fused into N.

    x4d_bf:     (B, H, W, C) bf16 activations.
    wfused_ref: (3*C, 3*C) bf16 weights; w[ky*C + cin, kx*C + cout].
    zrow:       (B, 1, W, C) bf16 zeros (H-boundary rows).
    mask_l:     (1, W, C) f32, 1.0 where the kx=0 (left) term is valid (w > 0).
    mask_r:     (1, W, C) f32, 1.0 where the kx=2 (right) term is valid (w < W-1).
    Returns     (B*H*W, C) float32.
    """
    B, H, W, C = x4d_bf.shape
    M = B * H * W

    # ky shifts: leading-dim concats (tile-aligned, cheap), all in bf16.
    up = jnp.concatenate([zrow, x4d_bf[:, :H - 1]], axis=1)   # x[h-1], zero at h=0
    dn = jnp.concatenate([x4d_bf[:, 1:], zrow], axis=1)       # x[h+1], zero at h=H-1
    lhs = jnp.concatenate([up, x4d_bf, dn], axis=-1).reshape(M, 3 * C)  # (M, 3C) bf16

    # Single MXU launch: (M, 3C) @ (3C, 3C) -> (M, 3C) f32 accumulation.
    y = jnp.dot(lhs, wfused_ref[...], preferred_element_type=jnp.float32)
    y = y.reshape(B * H, W, 3 * C)

    # 128-aligned lane slices: relayout-free.
    y_l = y[:, :, 0:C]          # kx = 0 tap
    y_c = y[:, :, C:2 * C]      # kx = 1 tap
    y_r = y[:, :, 2 * C:3 * C]  # kx = 2 tap

    # out[w] = y_c[w] + y_l[w-1] + y_r[w+1]  (zero outside the image).
    # kx shifts via non-negative sublane rolls (XLU) + tiny broadcast masks.
    acc = y_c
    acc = acc + mask_l * pltpu.roll(y_l, shift=1, axis=1)        # y_l[w-1]
    acc = acc + mask_r * pltpu.roll(y_r, shift=W - 1, axis=1)    # y_r[w+1] (cyclic -1)
    return acc.reshape(M, C)


def _bn_scale_shift(y2d, gamma, beta):
    """Training-mode BatchNorm2d folded to per-channel (scale, shift), one pass.

    NOTE: variance uses E[x^2] - mean^2 (single pass); adequate at the test
    tolerance since conv outputs are near zero-mean.
    """
    inv_m = 1.0 / y2d.shape[0]
    mean = jnp.sum(y2d, axis=0, keepdims=True) * inv_m          # (1, C)
    ex2 = jnp.sum(y2d * y2d, axis=0, keepdims=True) * inv_m     # (1, C)
    var = ex2 - mean * mean
    scale = gamma * lax.rsqrt(var + EPS)                        # (1, C), EUP rsqrt
    shift = beta - mean * scale                                 # (1, C)
    return scale, shift


def residual_block_kernel(x_ref, w1_ref, w2_ref, g1_ref, b1_ref,
                          g2_ref, b2_ref, out_ref):
    B, H, W, C = x_ref.shape
    M = B * H * W

    x_f32 = x_ref[...]                              # f32 copy kept for residual add
    x_bf = x_f32.astype(jnp.bfloat16)               # single cast for conv1 lhs
    zrow = jnp.zeros((B, 1, W, C), jnp.bfloat16)

    # Tiny W-boundary masks (one vreg each), reused by both convs.
    w_idx = lax.broadcasted_iota(jnp.int32, (1, W, C), 1)
    mask_l = (w_idx > 0).astype(jnp.float32)
    mask_r = (w_idx < W - 1).astype(jnp.float32)

    # conv1 -> bn1 -> relu  (h1 emitted directly as bf16 for conv2's lhs)
    y1 = _conv3x3(x_bf, w1_ref, zrow, mask_l, mask_r)                     # (M, C) f32
    s1, t1 = _bn_scale_shift(y1, g1_ref[...], b1_ref[...])
    h1 = jnp.maximum(y1 * s1 + t1, 0.0).astype(jnp.bfloat16)              # (M, C) bf16

    # conv2 -> bn2
    y2 = _conv3x3(h1.reshape(B, H, W, C), w2_ref, zrow, mask_l, mask_r)   # (M, C) f32
    s2, t2 = _bn_scale_shift(y2, g2_ref[...], b2_ref[...])
    h2 = y2 * s2 + t2

    # residual add + relu (identity is the clean, unpadded f32 input tile)
    out = jnp.maximum(h2 + x_f32.reshape(M, C), 0.0)
    out_ref[...] = out.reshape(B, H, W, C)


def prepare_params(w1_oihw, w2_oihw, g1, b1, g2, b2):
    """One-time parameter prep (hoisted out of the per-call forward path)."""
    C = w1_oihw.shape[0]

    def prep_w(w_oihw):
        # OIHW (cout, cin, kh, kw) -> fused rhs (kh*Cin + cin, kw*Cout + cout), bf16.
        w = jnp.transpose(w_oihw.astype(jnp.float32), (2, 1, 3, 0))   # (kh, cin, kw, cout)
        return w.reshape(3 * C, 3 * C).astype(jnp.bfloat16)

    return (prep_w(w1_oihw), prep_w(w2_oihw),
            g1.reshape(1, C).astype(jnp.float32),
            b1.reshape(1, C).astype(jnp.float32),
            g2.reshape(1, C).astype(jnp.float32),
            b2.reshape(1, C).astype(jnp.float32))


@jax.jit
def residual_block_nhwc(x_nhwc, wf1, wf2, g1, b1, g2, b2):
    """x_nhwc: (B, H, W, C) float32; weights already prepped by prepare_params."""
    B, H, W, C = x_nhwc.shape
    full4 = lambda i: (0, 0, 0, 0)
    full2 = lambda i: (0, 0)

    return pl.pallas_call(
        residual_block_kernel,
        out_shape=jax.ShapeDtypeStruct((B, H, W, C), jnp.float32),
        grid_spec=pltpu.PrefetchScalarGridSpec(
            num_scalar_prefetch=0,
            grid=(1,),
            in_specs=[
                pl.BlockSpec((B, H, W, C), full4),        # x (NHWC, unpadded)
                pl.BlockSpec((3 * C, 3 * C), full2),      # fused conv1 weights (bf16)
                pl.BlockSpec((3 * C, 3 * C), full2),      # fused conv2 weights (bf16)
                pl.BlockSpec((1, C), full2),              # gamma1
                pl.BlockSpec((1, C), full2),              # beta1
                pl.BlockSpec((1, C), full2),              # gamma2
                pl.BlockSpec((1, C), full2),              # beta2
            ],
            out_specs=pl.BlockSpec((B, H, W, C), full4),  # lane-dense (C=128)
        ),
        compiler_params=pltpu.CompilerParams(
            dimension_semantics=("arbitrary",)),
    )(x_nhwc, wf1, wf2, g1, b1, g2, b2)


def reference(x_nchw, w1, w2, g1, b1, g2, b2):
    """Pure-JAX reference matching the PyTorch forward (training-mode BN)."""
    def conv(x, w):
        return lax.conv_general_dilated(
            x, w, window_strides=(1, 1), padding="SAME",
            dimension_numbers=("NCHW", "OIHW", "NCHW"),
            precision=lax.Precision.HIGHEST)

    def bn(y, g, b):
        mean = jnp.mean(y, axis=(0, 2, 3), keepdims=True)
        var = jnp.mean(jnp.square(y - mean), axis=(0, 2, 3), keepdims=True)
        return ((y - mean) * lax.rsqrt(var + EPS) * g.reshape(1, -1, 1, 1)
                + b.reshape(1, -1, 1, 1))

    h = jax.nn.relu(bn(conv(x_nchw, w1), g1, b1))
    h = bn(conv(h, w2), g2, b2)
    return jax.nn.relu(h + x_nchw)


if __name__ == "__main__":
    # Small shapes consistent with the module (num_filters -> C; C=128 keeps the
    # channel dim lane-dense on TPU).
    B, C, H, W = 2, 128, 8, 8

    key = jax.random.PRNGKey(0)
    kx, k1, k2, kg1, kb1, kg2, kb2 = jax.random.split(key, 7)
    x_nchw = jax.random.normal(kx, (B, C, H, W), jnp.float32)
    # Deterministic synthetic parameters (PyTorch Conv2d weight layout OIHW, bias=False).
    w1 = 0.05 * jax.random.normal(k1, (C, C, 3, 3), jnp.float32)
    w2 = 0.05 * jax.random.normal(k2, (C, C, 3, 3), jnp.float32)
    g1 = 1.0 + 0.1 * jax.random.normal(kg1, (C,), jnp.float32)
    b1 = 0.1 * jax.random.normal(kb1, (C,), jnp.float32)
    g2 = 1.0 + 0.1 * jax.random.normal(kg2, (C,), jnp.float32)
    b2 = 0.1 * jax.random.normal(kb2, (C,), jnp.float32)

    # One-time prep (parameter-load time) + NHWC conversion outside the hot path.
    params = prepare_params(w1, w2, g1, b1, g2, b2)
    x_nhwc = jnp.transpose(x_nchw, (0, 2, 3, 1))

    out_nhwc = jax.block_until_ready(residual_block_nhwc(x_nhwc, *params))
    out_nchw = jnp.transpose(out_nhwc, (0, 3, 1, 2))

    ref = reference(x_nchw, w1, w2, g1, b1, g2, b2)
    err = jnp.abs(out_nchw - ref)
    tol = 5e-2 + 5e-2 * jnp.abs(ref)   # bf16 MXU vs f32 HIGHEST reference
    max_err = float(jnp.max(err))
    assert bool(jnp.all(err <= tol)), f"mismatch vs reference, max abs err = {max_err}"
    print("KERNEL_OK")
</pallas_src>

<mosaic_0001>
module attributes {stable_mosaic.version = 11 : i64} {
  func.func @residual_block_kernel(%arg0: i32, %arg1: memref<2x8x8x128xf32, #tpu.memory_space<vmem>>, %arg2: memref<384x384xbf16, #tpu.memory_space<vmem>>, %arg3: memref<384x384xbf16, #tpu.memory_space<vmem>>, %arg4: memref<1x128xf32, #tpu.memory_space<vmem>>, %arg5: memref<1x128xf32, #tpu.memory_space<vmem>>, %arg6: memref<1x128xf32, #tpu.memory_space<vmem>>, %arg7: memref<1x128xf32, #tpu.memory_space<vmem>>, %arg8: memref<2x8x8x128xf32, #tpu.memory_space<vmem>>) attributes {dimension_semantics = [#tpu.dimension_semantics<arbitrary>], iteration_bounds = array<i64: 1>, scalar_prefetch = 0 : i64, scratch_operands = 0 : i64, tpu.core_type = #tpu.core_type<tc>, window_params = [{pipeline_mode = #tpu.pipeline_mode<synchronous>, transform_indices = @transform_0, window_bounds = array<i64: 2, 8, 8, 128>}, {pipeline_mode = #tpu.pipeline_mode<synchronous>, transform_indices = @transform_1, window_bounds = array<i64: 384, 384>}, {pipeline_mode = #tpu.pipeline_mode<synchronous>, transform_indices = @transform_2, window_bounds = array<i64: 384, 384>}, {pipeline_mode = #tpu.pipeline_mode<synchronous>, transform_indices = @transform_3, window_bounds = array<i64: 1, 128>}, {pipeline_mode = #tpu.pipeline_mode<synchronous>, transform_indices = @transform_4, window_bounds = array<i64: 1, 128>}, {pipeline_mode = #tpu.pipeline_mode<synchronous>, transform_indices = @transform_5, window_bounds = array<i64: 1, 128>}, {pipeline_mode = #tpu.pipeline_mode<synchronous>, transform_indices = @transform_6, window_bounds = array<i64: 1, 128>}, {pipeline_mode = #tpu.pipeline_mode<synchronous>, transform_indices = @transform_7, window_bounds = array<i64: 2, 8, 8, 128>}]} {
    %c0 = arith.constant 0 : index
    %c0_0 = arith.constant 0 : index
    %c0_1 = arith.constant 0 : index
    %c0_2 = arith.constant 0 : index
    %0 = vector.load %arg1[%c0, %c0_0, %c0_1, %c0_2] : memref<2x8x8x128xf32, #tpu.memory_space<vmem>>, vector<2x8x8x128xf32>
    %1 = arith.truncf %0 : vector<2x8x8x128xf32> to vector<2x8x8x128xbf16>
    %cst = arith.constant 0.000000e+00 : bf16
    %2 = vector.broadcast %cst : bf16 to vector<2x1x8x128xbf16>
    %3 = tpu.iota {dimensions = array<i32: 1>} : vector<1x8x128xi32>
    %c0_i32 = arith.constant 0 : i32
    %4 = vector.broadcast %c0_i32 : i32 to vector<1x8x128xi32>
    %5 = arith.cmpi sgt, %3, %4 : vector<1x8x128xi32>
    %6 = arith.extui %5 : vector<1x8x128xi1> to vector<1x8x128xi32>
    %7 = arith.sitofp %6 : vector<1x8x128xi32> to vector<1x8x128xf32>
    %c7_i32 = arith.constant 7 : i32
    %8 = vector.broadcast %c7_i32 : i32 to vector<1x8x128xi32>
    %9 = arith.cmpi slt, %3, %8 : vector<1x8x128xi32>
    %10 = arith.extui %9 : vector<1x8x128xi1> to vector<1x8x128xi32>
    %11 = arith.sitofp %10 : vector<1x8x128xi32> to vector<1x8x128xf32>
    %12 = vector.extract_strided_slice %1 {offsets = [0, 0, 0, 0], sizes = [2, 7, 8, 128], strides = [1, 1, 1, 1]} : vector<2x8x8x128xbf16> to vector<2x7x8x128xbf16>
    %13 = tpu.concatenate %2, %12 in 1 : vector<2x1x8x128xbf16>, vector<2x7x8x128xbf16> -> vector<2x8x8x128xbf16>
    %14 = vector.extract_strided_slice %1 {offsets = [0, 1, 0, 0], sizes = [2, 7, 8, 128], strides = [1, 1, 1, 1]} : vector<2x8x8x128xbf16> to vector<2x7x8x128xbf16>
    %15 = tpu.concatenate %14, %2 in 1 : vector<2x7x8x128xbf16>, vector<2x1x8x128xbf16> -> vector<2x8x8x128xbf16>
    %16 = tpu.concatenate %13, %1, %15 in 3 : vector<2x8x8x128xbf16>, vector<2x8x8x128xbf16>, vector<2x8x8x128xbf16> -> vector<2x8x8x384xbf16>
    %17 = vector.shape_cast %16 : vector<2x8x8x384xbf16> to vector<128x384xbf16>
    %c0_3 = arith.constant 0 : index
    %c0_4 = arith.constant 0 : index
    %18 = vector.load %arg2[%c0_3, %c0_4] : memref<384x384xbf16, #tpu.memory_space<vmem>>, vector<384x384xbf16>
    %cst_5 = arith.constant dense<0.000000e+00> : vector<128x384xf32>
    %19 = tpu.matmul %17, %18, %cst_5 {dimension_numbers = #tpu.dot_dimension_numbers<[1], [0], [0], [1], [0, 0, 1, 1], [], []>} : vector<128x384xbf16>, vector<384x384xbf16>, vector<128x384xf32> -> vector<128x384xf32>
    %20 = vector.shape_cast %19 : vector<128x384xf32> to vector<16x8x384xf32>
    %21 = vector.extract_strided_slice %20 {offsets = [0, 0, 0], sizes = [16, 8, 128], strides = [1, 1, 1]} : vector<16x8x384xf32> to vector<16x8x128xf32>
    %22 = vector.extract_strided_slice %20 {offsets = [0, 0, 128], sizes = [16, 8, 128], strides = [1, 1, 1]} : vector<16x8x384xf32> to vector<16x8x128xf32>
    %23 = vector.extract_strided_slice %20 {offsets = [0, 0, 256], sizes = [16, 8, 128], strides = [1, 1, 1]} : vector<16x8x384xf32> to vector<16x8x128xf32>
    %c1_i32 = arith.constant 1 : i32
    %24 = tpu.dynamic_rotate %21 by %c1_i32 dim 1 : vector<16x8x128xf32>, i32 -> vector<16x8x128xf32>
    %25 = vector.broadcast %7 : vector<1x8x128xf32> to vector<16x8x128xf32>
    %26 = arith.mulf %25, %24 : vector<16x8x128xf32>
    %27 = arith.addf %22, %26 : vector<16x8x128xf32>
    %c7_i32_6 = arith.constant 7 : i32
    %28 = tpu.dynamic_rotate %23 by %c7_i32_6 dim 1 : vector<16x8x128xf32>, i32 -> vector<16x8x128xf32>
    %29 = vector.broadcast %11 : vector<1x8x128xf32> to vector<16x8x128xf32>
    %30 = arith.mulf %29, %28 : vector<16x8x128xf32>
    %31 = arith.addf %27, %30 : vector<16x8x128xf32>
    %32 = vector.shape_cast %31 : vector<16x8x128xf32> to vector<128x128xf32>
    %c0_7 = arith.constant 0 : index
    %c0_8 = arith.constant 0 : index
    %33 = vector.load %arg4[%c0_7, %c0_8] : memref<1x128xf32, #tpu.memory_space<vmem>>, vector<1x128xf32>
    %c0_9 = arith.constant 0 : index
    %c0_10 = arith.constant 0 : index
    %34 = vector.load %arg5[%c0_9, %c0_10] : memref<1x128xf32, #tpu.memory_space<vmem>>, vector<1x128xf32>
    %cst_11 = arith.constant dense<0.000000e+00> : vector<128xf32>
    %35 = vector.multi_reduction <add>, %32, %cst_11 [0] : vector<128x128xf32> to vector<128xf32>
    %36 = vector.shape_cast %35 : vector<128xf32> to vector<1x128xf32>
    %cst_12 = arith.constant 7.812500e-03 : f32
    %37 = vector.broadcast %cst_12 : f32 to vector<1x128xf32>
    %38 = arith.mulf %36, %37 : vector<1x128xf32>
    %39 = arith.mulf %32, %32 : vector<128x128xf32>
    %cst_13 = arith.constant dense<0.000000e+00> : vector<128xf32>
    %40 = vector.multi_reduction <add>, %39, %cst_13 [0] : vector<128x128xf32> to vector<128xf32>
    %41 = vector.shape_cast %40 : vector<128xf32> to vector<1x128xf32>
    %cst_14 = arith.constant 7.812500e-03 : f32
    %42 = vector.broadcast %cst_14 : f32 to vector<1x128xf32>
    %43 = arith.mulf %41, %42 : vector<1x128xf32>
    %44 = arith.mulf %38, %38 : vector<1x128xf32>
    %45 = arith.subf %43, %44 : vector<1x128xf32>
    %cst_15 = arith.constant 9.99999974E-6 : f32
    %46 = vector.broadcast %cst_15 : f32 to vector<1x128xf32>
    %47 = arith.addf %45, %46 : vector<1x128xf32>
    %48 = math.rsqrt %47 : vector<1x128xf32>
    %49 = arith.mulf %33, %48 : vector<1x128xf32>
    %50 = arith.mulf %38, %49 : vector<1x128xf32>
    %51 = arith.subf %34, %50 : vector<1x128xf32>
    %52 = vector.broadcast %49 : vector<1x128xf32> to vector<128x128xf32>
    %53 = arith.mulf %32, %52 : vector<128x128xf32>
    %54 = vector.broadcast %51 : vector<1x128xf32> to vector<128x128xf32>
    %55 = arith.addf %53, %54 : vector<128x128xf32>
    %cst_16 = arith.constant 0.000000e+00 : f32
    %56 = vector.broadcast %cst_16 : f32 to vector<128x128xf32>
    %57 = arith.maximumf %55, %56 : vector<128x128xf32>
    %58 = arith.truncf %57 : vector<128x128xf32> to vector<128x128xbf16>
    %59 = vector.shape_cast %58 : vector<128x128xbf16> to vector<2x8x8x128xbf16>
    %60 = vector.extract_strided_slice %59 {offsets = [0, 0, 0, 0], sizes = [2, 7, 8, 128], strides = [1, 1, 1, 1]} : vector<2x8x8x128xbf16> to vector<2x7x8x128xbf16>
    %61 = tpu.concatenate %2, %60 in 1 : vector<2x1x8x128xbf16>, vector<2x7x8x128xbf16> -> vector<2x8x8x128xbf16>
    %62 = vector.extract_strided_slice %59 {offsets = [0, 1, 0, 0], sizes = [2, 7, 8, 128], strides = [1, 1, 1, 1]} : vector<2x8x8x128xbf16> to vector<2x7x8x128xbf16>
    %63 = tpu.concatenate %62, %2 in 1 : vector<2x7x8x128xbf16>, vector<2x1x8x128xbf16> -> vector<2x8x8x128xbf16>
    %64 = tpu.concatenate %61, %59, %63 in 3 : vector<2x8x8x128xbf16>, vector<2x8x8x128xbf16>, vector<2x8x8x128xbf16> -> vector<2x8x8x384xbf16>
    %65 = vector.shape_cast %64 : vector<2x8x8x384xbf16> to vector<128x384xbf16>
    %c0_17 = arith.constant 0 : index
    %c0_18 = arith.constant 0 : index
    %66 = vector.load %arg3[%c0_17, %c0_18] : memref<384x384xbf16, #tpu.memory_space<vmem>>, vector<384x384xbf16>
    %cst_19 = arith.constant dense<0.000000e+00> : vector<128x384xf32>
    %67 = tpu.matmul %65, %66, %cst_19 {dimension_numbers = #tpu.dot_dimension_numbers<[1], [0], [0], [1], [0, 0, 1, 1], [], []>} : vector<128x384xbf16>, vector<384x384xbf16>, vector<128x384xf32> -> vector<128x384xf32>
    %68 = vector.shape_cast %67 : vector<128x384xf32> to vector<16x8x384xf32>
    %69 = vector.extract_strided_slice %68 {offsets = [0, 0, 0], sizes = [16, 8, 128], strides = [1, 1, 1]} : vector<16x8x384xf32> to vector<16x8x128xf32>
    %70 = vector.extract_strided_slice %68 {offsets = [0, 0, 128], sizes = [16, 8, 128], strides = [1, 1, 1]} : vector<16x8x384xf32> to vector<16x8x128xf32>
    %71 = vector.extract_strided_slice %68 {offsets = [0, 0, 256], sizes = [16, 8, 128], strides = [1, 1, 1]} : vector<16x8x384xf32> to vector<16x8x128xf32>
    %c1_i32_20 = arith.constant 1 : i32
    %72 = tpu.dynamic_rotate %69 by %c1_i32_20 dim 1 : vector<16x8x128xf32>, i32 -> vector<16x8x128xf32>
    %73 = vector.broadcast %7 : vector<1x8x128xf32> to vector<16x8x128xf32>
    %74 = arith.mulf %73, %72 : vector<16x8x128xf32>
    %75 = arith.addf %70, %74 : vector<16x8x128xf32>
    %c7_i32_21 = arith.constant 7 : i32
    %76 = tpu.dynamic_rotate %71 by %c7_i32_21 dim 1 : vector<16x8x128xf32>, i32 -> vector<16x8x128xf32>
    %77 = vector.broadcast %11 : vector<1x8x128xf32> to vector<16x8x128xf32>
    %78 = arith.mulf %77, %76 : vector<16x8x128xf32>
    %79 = arith.addf %75, %78 : vector<16x8x128xf32>
    %80 = vector.shape_cast %79 : vector<16x8x128xf32> to vector<128x128xf32>
    %c0_22 = arith.constant 0 : index
    %c0_23 = arith.constant 0 : index
    %81 = vector.load %arg6[%c0_22, %c0_23] : memref<1x128xf32, #tpu.memory_space<vmem>>, vector<1x128xf32>
    %c0_24 = arith.constant 0 : index
    %c0_25 = arith.constant 0 : index
    %82 = vector.load %arg7[%c0_24, %c0_25] : memref<1x128xf32, #tpu.memory_space<vmem>>, vector<1x128xf32>
    %cst_26 = arith.constant dense<0.000000e+00> : vector<128xf32>
    %83 = vector.multi_reduction <add>, %80, %cst_26 [0] : vector<128x128xf32> to vector<128xf32>
    %84 = vector.shape_cast %83 : vector<128xf32> to vector<1x128xf32>
    %cst_27 = arith.constant 7.812500e-03 : f32
    %85 = vector.broadcast %cst_27 : f32 to vector<1x128xf32>
    %86 = arith.mulf %84, %85 : vector<1x128xf32>
    %87 = arith.mulf %80, %80 : vector<128x128xf32>
    %cst_28 = arith.constant dense<0.000000e+00> : vector<128xf32>
    %88 = vector.multi_reduction <add>, %87, %cst_28 [0] : vector<128x128xf32> to vector<128xf32>
    %89 = vector.shape_cast %88 : vector<128xf32> to vector<1x128xf32>
    %cst_29 = arith.constant 7.812500e-03 : f32
    %90 = vector.broadcast %cst_29 : f32 to vector<1x128xf32>
    %91 = arith.mulf %89, %90 : vector<1x128xf32>
    %92 = arith.mulf %86, %86 : vector<1x128xf32>
    %93 = arith.subf %91, %92 : vector<1x128xf32>
    %cst_30 = arith.constant 9.99999974E-6 : f32
    %94 = vector.broadcast %cst_30 : f32 to vector<1x128xf32>
    %95 = arith.addf %93, %94 : vector<1x128xf32>
    %96 = math.rsqrt %95 : vector<1x128xf32>
    %97 = arith.mulf %81, %96 : vector<1x128xf32>
    %98 = arith.mulf %86, %97 : vector<1x128xf32>
    %99 = arith.subf %82, %98 : vector<1x128xf32>
    %100 = vector.broadcast %97 : vector<1x128xf32> to vector<128x128xf32>
    %101 = arith.mulf %80, %100 : vector<128x128xf32>
    %102 = vector.broadcast %99 : vector<1x128xf32> to vector<128x128xf32>
    %103 = arith.addf %101, %102 : vector<128x128xf32>
    %104 = vector.shape_cast %0 : vector<2x8x8x128xf32> to vector<128x128xf32>
    %105 = arith.addf %103, %104 : vector<128x128xf32>
    %cst_31 = arith.constant 0.000000e+00 : f32
    %106 = vector.broadcast %cst_31 : f32 to vector<128x128xf32>
    %107 = arith.maximumf %105, %106 : vector<128x128xf32>
    %108 = vector.shape_cast %107 : vector<128x128xf32> to vector<2x8x8x128xf32>
    %c0_32 = arith.constant 0 : index
    %c0_33 = arith.constant 0 : index
    %c0_34 = arith.constant 0 : index
    %c0_35 = arith.constant 0 : index
    %109 = vector.load %arg8[%c0_32, %c0_33, %c0_34, %c0_35] : memref<2x8x8x128xf32, #tpu.memory_space<vmem>>, vector<2x8x8x128xf32>
    tpu.vector_store %arg8[%c0_32, %c0_33, %c0_34, %c0_35], %108 {strides = array<i32>} : memref<2x8x8x128xf32, #tpu.memory_space<vmem>>, vector<2x8x8x128xf32>,
    return
  }
  func.func @transform_0(%arg0: i32) -> (i32, i32, i32, i32) {
    %c0_i32 = arith.constant 0 : i32
    %c0_i32_0 = arith.constant 0 : i32
    %c0_i32_1 = arith.constant 0 : i32
    %c0_i32_2 = arith.constant 0 : i32
    %c0_i32_3 = arith.constant 0 : i32
    return %c0_i32, %c0_i32_0, %c0_i32_1, %c0_i32_2 : i32, i32, i32, i32
  }
  func.func @transform_1(%arg0: i32) -> (i32, i32) {
    %c0_i32 = arith.constant 0 : i32
    %c0_i32_0 = arith.constant 0 : i32
    %c0_i32_1 = arith.constant 0 : i32
    return %c0_i32, %c0_i32_0 : i32, i32
  }
  func.func @transform_2(%arg0: i32) -> (i32, i32) {
    %c0_i32 = arith.constant 0 : i32
    %c0_i32_0 = arith.constant 0 : i32
    %c0_i32_1 = arith.constant 0 : i32
    return %c0_i32, %c0_i32_0 : i32, i32
  }
  func.func @transform_3(%arg0: i32) -> (i32, i32) {
    %c0_i32 = arith.constant 0 : i32
    %c0_i32_0 = arith.constant 0 : i32
    %c0_i32_1 = arith.constant 0 : i32
    return %c0_i32, %c0_i32_0 : i32, i32
  }
  func.func @transform_4(%arg0: i32) -> (i32, i32) {
    %c0_i32 = arith.constant 0 : i32
    %c0_i32_0 = arith.constant 0 : i32
    %c0_i32_1 = arith.constant 0 : i32
    return %c0_i32, %c0_i32_0 : i32, i32
  }
  func.func @transform_5(%arg0: i32) -> (i32, i32) {
    %c0_i32 = arith.constant 0 : i32
    %c0_i32_0 = arith.constant 0 : i32
    %c0_i32_1 = arith.constant 0 : i32
    return %c0_i32, %c0_i32_0 : i32, i32
  }
  func.func @transform_6(%arg0: i32) -> (i32, i32) {
    %c0_i32 = arith.constant 0 : i32
    %c0_i32_0 = arith.constant 0 : i32
    %c0_i32_1 = arith.constant 0 : i32
    return %c0_i32, %c0_i32_0 : i32, i32
  }
  func.func @transform_7(%arg0: i32) -> (i32, i32, i32, i32) {
    %c0_i32 = arith.constant 0 : i32
    %c0_i32_0 = arith.constant 0 : i32
    %c0_i32_1 = arith.constant 0 : i32
    %c0_i32_2 = arith.constant 0 : i32
    %c0_i32_3 = arith.constant 0 : i32
    return %c0_i32, %c0_i32_0, %c0_i32_1, %c0_i32_2 : i32, i32, i32, i32
  }
}

</mosaic_0001>

<llo_original>
// kernel: residual_block_nhwc.1
$region0: #{residual_block_nhwc.1}
  #allocation0 [shape = 'u32[]', space=smem, size = 0x4, offset = 0x4, fixed_abs, tag = 'smem constant byte address 0x4 - core index']
  #allocation1 [shape = 'u32[144,128]{1,0:T(1,128)}', space=vmem, size = 0x12000, scoped, tag = 'internal scratch']
  %s0 = inlined_call_operand.hbm [shape: f32[2,8,8,128], index: 0, kind: input, shape index: {}]
  %s1 = inlined_call_operand.hbm [shape: bf16[384,384], index: 1, kind: input, shape index: {}]
  %s2 = inlined_call_operand.hbm [shape: bf16[384,384], index: 2, kind: input, shape index: {}]
  %s3 = inlined_call_operand.vmem [shape: f32[1,128], index: 3, kind: input, shape index: {}]
  %s4 = inlined_call_operand.vmem [shape: f32[1,128], index: 4, kind: input, shape index: {}]
  %s5 = inlined_call_operand.vmem [shape: f32[1,128], index: 5, kind: input, shape index: {}]
  %s6 = inlined_call_operand.vmem [shape: f32[1,128], index: 6, kind: input, shape index: {}]
  %s7 = inlined_call_operand.hbm [shape: f32[2,8,8,128], index: 7, kind: output, shape index: {}]
  %s8 = sld [smem:[#allocation0]]
  $region50: #{residual_block_nhwc.1} parent=0
    _
  %s10 = ssub.s32 1, %s8
  %s11 = scalar_select 0, %s10, %s8
  $region1: #{residual_block_nhwc.1} parent=0
    #allocation2 [shape = 'u8[65536]{0}', space=vmem, size = 0x10000, scoped, tag = 'input window, operand 0, single buffered']
    #allocation3 [shape = 's32[1]{0}', space=sflag, size = 0x4, scoped, tag = 'scoped memory for residual_block_nhwc.1']
    #allocation4 [shape = 's32[1]{0}', space=sflag, size = 0x4, scoped, tag = 'scoped memory for residual_block_nhwc.1']
    #allocation5 [shape = 'u8[294912]{0}', space=vmem, size = 0x48000, scoped, tag = 'input window, operand 1, single buffered']
    #allocation6 [shape = 's32[1]{0}', space=sflag, size = 0x4, scoped, tag = 'scoped memory for residual_block_nhwc.1']
    #allocation7 [shape = 'u8[294912]{0}', space=vmem, size = 0x48000, scoped, tag = 'input window, operand 2, single buffered']
    #allocation8 [shape = 'u8[65536]{0}', space=vmem, size = 0x10000, scoped, tag = 'output window, operand 0, single buffered']
    %12 = vsyncpa [#allocation3], 0
    %13 = vsyncpa [#allocation6], 0
    %14 = vsyncpa [#allocation4], 0
    // Predicated region
    $region2: #{residual_block_nhwc.1} parent=1 // pred_check
      _
    $region3: #{residual_block_nhwc.1} parent=1 // pred_check_branch
      %16 = sbr.rel (0) target = $region5
    $region4: #{residual_block_nhwc.1} parent=1 // pred_region
      %s18 = ssub.s32 2048, 2048
      %19 = vsyncadd [#allocation3], %s18
      %s20 = sshll.u32 [#allocation2], 4
      %s21 = int_to_ptr.vmem [resolvable:$true] %s20
      %26 = dma.hbm_to_vmem [thread:$0]  %s0, 2048, %s21, [#allocation3], 128, 128, 8
    $region5: #{residual_block_nhwc.1} parent=1 // pred_fallthru
      _
    // Predicated region
    $region6: #{residual_block_nhwc.1} parent=1 // pred_check
      _
    $region7: #{residual_block_nhwc.1} parent=1 // pred_check_branch
      %28 = sbr.rel (0) target = $region9
    $region8: #{residual_block_nhwc.1} parent=1 // pred_region
      %s30 = ssub.s32 9216, 9216
      %31 = vsyncadd [#allocation6], %s30
      %s32 = sshll.u32 [#allocation5], 4
      %s33 = int_to_ptr.vmem [resolvable:$true] %s32
      %38 = dma.hbm_to_vmem [thread:$0]  %s1, 9216, %s33, [#allocation6], 192, 192, 12
    $region9: #{residual_block_nhwc.1} parent=1 // pred_fallthru
      _
    // Predicated region
    $region10: #{residual_block_nhwc.1} parent=1 // pred_check
      _
    $region11: #{residual_block_nhwc.1} parent=1 // pred_check_branch
      %40 = sbr.rel (0) target = $region13
    $region12: #{residual_block_nhwc.1} parent=1 // pred_region
      %s42 = ssub.s32 9216, 9216
      %43 = vsyncadd [#allocation6], %s42
      %s44 = sshll.u32 [#allocation7], 4
      %s45 = int_to_ptr.vmem [resolvable:$true] %s44
      %50 = dma.hbm_to_vmem [thread:$0]  %s2, 9216, %s45, [#allocation6], 192, 192, 12
    $region13: #{residual_block_nhwc.1} parent=1 // pred_fallthru
      _
    // Predicated region
    $region14: #{residual_block_nhwc.1} parent=1 // pred_check
      _
    $region15: #{residual_block_nhwc.1} parent=1 // pred_check_branch
      %52 = sbr.rel (0) target = $region17
    $region16: #{residual_block_nhwc.1} parent=1 // pred_region
      _
    $region17: #{residual_block_nhwc.1} parent=1 // pred_fallthru
      _
    // Predicated region
    $region18: #{residual_block_nhwc.1} parent=1 // pred_check
      _
    $region19: #{residual_block_nhwc.1} parent=1 // pred_check_branch
      %54 = sbr.rel (0) target = $region21
    $region20: #{residual_block_nhwc.1} parent=1 // pred_region
      _
    $region21: #{residual_block_nhwc.1} parent=1 // pred_fallthru
      _
    // Predicated region
    $region22: #{residual_block_nhwc.1} parent=1 // pred_check
      _
    $region23: #{residual_block_nhwc.1} parent=1 // pred_check_branch
      %56 = sbr.rel (0) target = $region25
    $region24: #{residual_block_nhwc.1} parent=1 // pred_region
      _
    $region25: #{residual_block_nhwc.1} parent=1 // pred_fallthru
      _
    // Predicated region
    $region26: #{residual_block_nhwc.1} parent=1 // pred_check
      _
    $region27: #{residual_block_nhwc.1} parent=1 // pred_check_branch
      %58 = sbr.rel (0) target = $region29
    $region28: #{residual_block_nhwc.1} parent=1 // pred_region
      _
    $region29: #{residual_block_nhwc.1} parent=1 // pred_fallthru
      _
    // Predicated region
    $region30: #{residual_block_nhwc.1} parent=1 // pred_check
      _
    $region31: #{residual_block_nhwc.1} parent=1 // pred_check_branch
      %60 = sbr.rel (0) target = $region33
    $region32: #{residual_block_nhwc.1} parent=1 // pred_region
      %61 = dma.done [#allocation3], 2048
    $region33: #{residual_block_nhwc.1} parent=1 // pred_fallthru
      _
    // Predicated region
    $region34: #{residual_block_nhwc.1} parent=1 // pred_check
      _
    $region35: #{residual_block_nhwc.1} parent=1 // pred_check_branch
      %63 = sbr.rel (0) target = $region37
    $region36: #{residual_block_nhwc.1} parent=1 // pred_region
      %64 = dma.done [#allocation6], 9216
    $region37: #{residual_block_nhwc.1} parent=1 // pred_fallthru
      _
    // Predicated region
    $region38: #{residual_block_nhwc.1} parent=1 // pred_check
      _
    $region39: #{residual_block_nhwc.1} parent=1 // pred_check_branch
      %66 = sbr.rel (0) target = $region41
    $region40: #{residual_block_nhwc.1} parent=1 // pred_region
      %67 = dma.done [#allocation6], 9216
    $region41: #{residual_block_nhwc.1} parent=1 // pred_fallthru
      _
    %v69 = vld [vmem:[#allocation2] sm:$0xff]
    %v70 = vld [vmem:[#allocation2 + $0x8] sm:$0xff]
    %v71 = vld [vmem:[#allocation2 + $0x10] sm:$0xff]
    %v72 = vld [vmem:[#allocation2 + $0x18] sm:$0xff]
    %v73 = vld [vmem:[#allocation2 + $0x20] sm:$0xff]
    %v74 = vld [vmem:[#allocation2 + $0x28] sm:$0xff]
    %v75 = vld [vmem:[#allocation2 + $0x30] sm:$0xff]
    %v76 = vld [vmem:[#allocation2 + $0x38] sm:$0xff]
    %v77 = vld [vmem:[#allocation2 + $0x40] sm:$0xff]
    %v78 = vld [vmem:[#allocation2 + $0x48] sm:$0xff]
    %v79 = vld [vmem:[#allocation2 + $0x50] sm:$0xff]
    %v80 = vld [vmem:[#allocation2 + $0x58] sm:$0xff]
    %v81 = vld [vmem:[#allocation2 + $0x60] sm:$0xff]
    %v82 = vld [vmem:[#allocation2 + $0x68] sm:$0xff]
    %v83 = vld [vmem:[#allocation2 + $0x70] sm:$0xff]
    %v84 = vld [vmem:[#allocation2 + $0x78] sm:$0xff]
    %v85 = vpack.c.bf16 %v69, %v69
    %v86 = vpack.c.bf16 %v70, %v70
    %v87 = vpack.c.bf16 %v71, %v71
    %v88 = vpack.c.bf16 %v72, %v72
    %v89 = vpack.c.bf16 %v73, %v73
    %v90 = vpack.c.bf16 %v74, %v74
    %v91 = vpack.c.bf16 %v75, %v75
    %v92 = vpack.c.bf16 %v76, %v76
    %v93 = vpack.c.bf16 %v77, %v77
    %v94 = vpack.c.bf16 %v78, %v78
    %v95 = vpack.c.bf16 %v79, %v79
    %v96 = vpack.c.bf16 %v80, %v80
    %v97 = vpack.c.bf16 %v81, %v81
    %v98 = vpack.c.bf16 %v82, %v82
    %v99 = vpack.c.bf16 %v83, %v83
    %v100 = vpack.c.bf16 %v84, %v84
    %v101 = vlaneseq
    %v102 = vshrl.u32 %v101, 7
    %vm103 = vcmp.gt.s32.totalorder %v102, 0
    %v104 = vsel %vm103, 1, 0
    %v105 = vcvt.s32.f32 %v104
    %vm106 = vcmp.lt.s32.totalorder %v102, 7
    %v107 = vsel %vm106, 1, 0
    %v108 = vcvt.s32.f32 %v107
    %v126 = vunpack.c.l.b16 0
    %v127 = vunpack.c.l.b16 %v85
    %v128 = vunpack.c.l.b16 %v86
    %v129 = vunpack.c.l.b16 %v87
    %v130 = vunpack.c.l.b16 %v88
    %v131 = vunpack.c.l.b16 %v89
    %v132 = vunpack.c.l.b16 %v90
    %v133 = vunpack.c.l.b16 %v91
    %v134 = vunpack.c.l.b16 %v92
    %v135 = vunpack.c.l.b16 %v93
    %v136 = vunpack.c.l.b16 %v94
    %v137 = vunpack.c.l.b16 %v95
    %v138 = vunpack.c.l.b16 %v96
    %v139 = vunpack.c.l.b16 %v97
    %v140 = vunpack.c.l.b16 %v98
    %v141 = vunpack.c.l.b16 %v99
    %v142 = vunpack.c.l.b16 %v100
    %v143 = vld [vmem:[#allocation5] sm:$0xff]
    %v144 = vld [vmem:[#allocation5 + $0x8] sm:$0xf]
    %v145 = vld [vmem:[#allocation5 + $0xc] sm:$0xff]
    %v146 = vld [vmem:[#allocation5 + $0x14] sm:$0xf]
    %v147 = vld [vmem:[#allocation5 + $0x18] sm:$0xff]
    %v148 = vld [vmem:[#allocation5 + $0x20] sm:$0xf]
    %v149 = vld [vmem:[#allocation5 + $0x24] sm:$0xff]
    %v150 = vld [vmem:[#allocation5 + $0x2c] sm:$0xf]
    %v151 = vld [vmem:[#allocation5 + $0x30] sm:$0xff]
    %v152 = vld [vmem:[#allocation5 + $0x38] sm:$0xf]
    %v153 = vld [vmem:[#allocation5 + $0x3c] sm:$0xff]
    %v154 = vld [vmem:[#allocation5 + $0x44] sm:$0xf]
    %v155 = vld [vmem:[#allocation5 + $0x48] sm:$0xff]
    %v156 = vld [vmem:[#allocation5 + $0x50] sm:$0xf]
    %v157 = vld [vmem:[#allocation5 + $0x54] sm:$0xff]
    %v158 = vld [vmem:[#allocation5 + $0x5c] sm:$0xf]
    %v159 = vld [vmem:[#allocation5 + $0x60] sm:$0xff]
    %v160 = vld [vmem:[#allocation5 + $0x68] sm:$0xf]
    %v161 = vld [vmem:[#allocation5 + $0x6c] sm:$0xff]
    %v162 = vld [vmem:[#allocation5 + $0x74] sm:$0xf]
    %v163 = vld [vmem:[#allocation5 + $0x78] sm:$0xff]
    %v164 = vld [vmem:[#allocation5 + $0x80] sm:$0xf]
    %v165 = vld [vmem:[#allocation5 + $0x84] sm:$0xff]
    %v166 = vld [vmem:[#allocation5 + $0x8c] sm:$0xf]
    %v167 = vld [vmem:[#allocation5 + $0x90] sm:$0xff]
    %v168 = vld [vmem:[#allocation5 + $0x98] sm:$0xf]
    %v169 = vld [vmem:[#allocation5 + $0x9c] sm:$0xff]
    %v170 = vld [vmem:[#allocation5 + $0xa4] sm:$0xf]
    %v171 = vld [vmem:[#allocation5 + $0xa8] sm:$0xff]
    %v172 = vld [vmem:[#allocation5 + $0xb0] sm:$0xf]
    %v173 = vld [vmem:[#allocation5 + $0xb4] sm:$0xff]
    %v174 = vld [vmem:[#allocation5 + $0xbc] sm:$0xf]
    %v175 = vld [vmem:[#allocation5 + $0xc0] sm:$0xff]
    %v176 = vld [vmem:[#allocation5 + $0xc8] sm:$0xf]
    %v177 = vld [vmem:[#allocation5 + $0xcc] sm:$0xff]
    %v178 = vld [vmem:[#allocation5 + $0xd4] sm:$0xf]
    %v179 = vld [vmem:[#allocation5 + $0xd8] sm:$0xff]
    %v180 = vld [vmem:[#allocation5 + $0xe0] sm:$0xf]
    %v181 = vld [vmem:[#allocation5 + $0xe4] sm:$0xff]
    %v182 = vld [vmem:[#allocation5 + $0xec] sm:$0xf]
    %v183 = vld [vmem:[#allocation5 + $0xf0] sm:$0xff]
    %v184 = vld [vmem:[#allocation5 + $0xf8] sm:$0xf]
    %v185 = vld [vmem:[#allocation5 + $0xfc] sm:$0xff]
    %v186 = vld [vmem:[#allocation5 + $0x104] sm:$0xf]
    %v187 = vld [vmem:[#allocation5 + $0x108] sm:$0xff]
    %v188 = vld [vmem:[#allocation5 + $0x110] sm:$0xf]
    %v189 = vld [vmem:[#allocation5 + $0x114] sm:$0xff]
    %v190 = vld [vmem:[#allocation5 + $0x11c] sm:$0xf]
    %v191 = vld [vmem:[#allocation5 + $0x120] sm:$0xff]
    %v192 = vld [vmem:[#allocation5 + $0x128] sm:$0xf]
    %v193 = vld [vmem:[#allocation5 + $0x12c] sm:$0xff]
    %v194 = vld [vmem:[#allocation5 + $0x134] sm:$0xf]
    %v195 = vld [vmem:[#allocation5 + $0x138] sm:$0xff]
    %v196 = vld [vmem:[#allocation5 + $0x140] sm:$0xf]
    %v197 = vld [vmem:[#allocation5 + $0x144] sm:$0xff]
    %v198 = vld [vmem:[#allocation5 + $0x14c] sm:$0xf]
    %v199 = vld [vmem:[#allocation5 + $0x150] sm:$0xff]
    %v200 = vld [vmem:[#allocation5 + $0x158] sm:$0xf]
    %v201 = vld [vmem:[#allocation5 + $0x15c] sm:$0xff]
    %v202 = vld [vmem:[#allocation5 + $0x164] sm:$0xf]
    %v203 = vld [vmem:[#allocation5 + $0x168] sm:$0xff]
    %v204 = vld [vmem:[#allocation5 + $0x170] sm:$0xf]
    %v205 = vld [vmem:[#allocation5 + $0x174] sm:$0xff]
    %v206 = vld [vmem:[#allocation5 + $0x17c] sm:$0xf]
    %v207 = vld [vmem:[#allocation5 + $0x180] sm:$0xff]
    %v208 = vld [vmem:[#allocation5 + $0x188] sm:$0xf]
    %v209 = vld [vmem:[#allocation5 + $0x18c] sm:$0xff]
    %v210 = vld [vmem:[#allocation5 + $0x194] sm:$0xf]
    %v211 = vld [vmem:[#allocation5 + $0x198] sm:$0xff]
    %v212 = vld [vmem:[#allocation5 + $0x1a0] sm:$0xf]
    %v213 = vld [vmem:[#allocation5 + $0x1a4] sm:$0xff]
    %v214 = vld [vmem:[#allocation5 + $0x1ac] sm:$0xf]
    %v215 = vld [vmem:[#allocation5 + $0x1b0] sm:$0xff]
    %v216 = vld [vmem:[#allocation5 + $0x1b8] sm:$0xf]
    %v217 = vld [vmem:[#allocation5 + $0x1bc] sm:$0xff]
    %v218 = vld [vmem:[#allocation5 + $0x1c4] sm:$0xf]
    %v219 = vld [vmem:[#allocation5 + $0x1c8] sm:$0xff]
    %v220 = vld [vmem:[#allocation5 + $0x1d0] sm:$0xf]
    %v221 = vld [vmem:[#allocation5 + $0x1d4] sm:$0xff]
    %v222 = vld [vmem:[#allocation5 + $0x1dc] sm:$0xf]
    %v223 = vld [vmem:[#allocation5 + $0x1e0] sm:$0xff]
    %v224 = vld [vmem:[#allocation5 + $0x1e8] sm:$0xf]
    %v225 = vld [vmem:[#allocation5 + $0x1ec] sm:$0xff]
    %v226 = vld [vmem:[#allocation5 + $0x1f4] sm:$0xf]
    %v227 = vld [vmem:[#allocation5 + $0x1f8] sm:$0xff]
    %v228 = vld [vmem:[#allocation5 + $0x200] sm:$0xf]
    %v229 = vld [vmem:[#allocation5 + $0x204] sm:$0xff]
    %v230 = vld [vmem:[#allocation5 + $0x20c] sm:$0xf]
    %v231 = vld [vmem:[#allocation5 + $0x210] sm:$0xff]
    %v232 = vld [vmem:[#allocation5 + $0x218] sm:$0xf]
    %v233 = vld [vmem:[#allocation5 + $0x21c] sm:$0xff]
    %v234 = vld [vmem:[#allocation5 + $0x224] sm:$0xf]
    %v235 = vld [vmem:[#allocation5 + $0x228] sm:$0xff]
    %v236 = vld [vmem:[#allocation5 + $0x230] sm:$0xf]
    %v237 = vld [vmem:[#allocation5 + $0x234] sm:$0xff]
    %v238 = vld [vmem:[#allocation5 + $0x23c] sm:$0xf]
    %v239 = vpack.c.b16 %v127, %v126
    %v240 = vpack.c.b16 %v128, %v127
    %v241 = vpack.c.b16 %v129, %v128
    %v242 = vpack.c.b16 %v130, %v129
    %v243 = vpack.c.b16 %v131, %v130
    %v244 = vpack.c.b16 %v132, %v131
    %v245 = vpack.c.b16 %v133, %v132
    %v246 = vpack.c.b16 %v134, %v133
    %v247 = vpack.c.b16 %v126, %v134
    %v248 = vpack.c.b16 %v135, %v126
    %v249 = vpack.c.b16 %v136, %v135
    %v250 = vpack.c.b16 %v137, %v136
    %v251 = vpack.c.b16 %v138, %v137
    %v252 = vpack.c.b16 %v139, %v138
    %v253 = vpack.c.b16 %v140, %v139
    %v254 = vpack.c.b16 %v141, %v140
    %v255 = vpack.c.b16 %v142, %v141
    %v256 = vpack.c.b16 %v126, %v142
    %v371 = vunpack.c.l.b16 %v143
    %v372 = vunpack.c.h.b16 %v143
    %v373 = vunpack.c.l.b16 %v144
    %v374 = vunpack.c.l.b16 %v145
    %v375 = vunpack.c.h.b16 %v145
    %v376 = vunpack.c.l.b16 %v146
    %v377 = vunpack.c.l.b16 %v147
    %v378 = vunpack.c.h.b16 %v147
    %v379 = vunpack.c.l.b16 %v148
    %v380 = vunpack.c.l.b16 %v149
    %v381 = vunpack.c.h.b16 %v149
    %v382 = vunpack.c.l.b16 %v150
    %v383 = vunpack.c.l.b16 %v151
    %v384 = vunpack.c.h.b16 %v151
    %v385 = vunpack.c.l.b16 %v152
    %v386 = vunpack.c.l.b16 %v153
    %v387 = vunpack.c.h.b16 %v153
    %v388 = vunpack.c.l.b16 %v154
    %v389 = vunpack.c.l.b16 %v155
    %v390 = vunpack.c.h.b16 %v155
    %v391 = vunpack.c.l.b16 %v156
    %v392 = vunpack.c.l.b16 %v157
    %v393 = vunpack.c.h.b16 %v157
    %v394 = vunpack.c.l.b16 %v158
    %v395 = vunpack.c.l.b16 %v159
    %v396 = vunpack.c.h.b16 %v159
    %v397 = vunpack.c.l.b16 %v160
    %v398 = vunpack.c.l.b16 %v161
    %v399 = vunpack.c.h.b16 %v161
    %v400 = vunpack.c.l.b16 %v162
    %v401 = vunpack.c.l.b16 %v163
    %v402 = vunpack.c.h.b16 %v163
    %v403 = vunpack.c.l.b16 %v164
    %v404 = vunpack.c.l.b16 %v165
    %v405 = vunpack.c.h.b16 %v165
    %v406 = vunpack.c.l.b16 %v166
    %v407 = vunpack.c.l.b16 %v167
    %v408 = vunpack.c.h.b16 %v167
    %v409 = vunpack.c.l.b16 %v168
    %v410 = vunpack.c.l.b16 %v169
    %v411 = vunpack.c.h.b16 %v169
    %v412 = vunpack.c.l.b16 %v170
    %v413 = vunpack.c.l.b16 %v171
    %v414 = vunpack.c.h.b16 %v171
    %v415 = vunpack.c.l.b16 %v172
    %v416 = vunpack.c.l.b16 %v173
    %v417 = vunpack.c.h.b16 %v173
    %v418 = vunpack.c.l.b16 %v174
    %v419 = vunpack.c.l.b16 %v175
    %v420 = vunpack.c.h.b16 %v175
    %v421 = vunpack.c.l.b16 %v176
    %v422 = vunpack.c.l.b16 %v177
    %v423 = vunpack.c.h.b16 %v177
    %v424 = vunpack.c.l.b16 %v178
    %v425 = vunpack.c.l.b16 %v179
    %v426 = vunpack.c.h.b16 %v179
    %v427 = vunpack.c.l.b16 %v180
    %v428 = vunpack.c.l.b16 %v181
    %v429 = vunpack.c.h.b16 %v181
    %v430 = vunpack.c.l.b16 %v182
    %v431 = vunpack.c.l.b16 %v183
    %v432 = vunpack.c.h.b16 %v183
    %v433 = vunpack.c.l.b16 %v184
    %v434 = vunpack.c.l.b16 %v185
    %v435 = vunpack.c.h.b16 %v185
    %v436 = vunpack.c.l.b16 %v186
    %v437 = vunpack.c.l.b16 %v187
    %v438 = vunpack.c.h.b16 %v187
    %v439 = vunpack.c.l.b16 %v188
    %v440 = vunpack.c.l.b16 %v189
    %v441 = vunpack.c.h.b16 %v189
    %v442 = vunpack.c.l.b16 %v190
    %v443 = vunpack.c.l.b16 %v191
    %v444 = vunpack.c.h.b16 %v191
    %v445 = vunpack.c.l.b16 %v192
    %v446 = vunpack.c.l.b16 %v193
    %v447 = vunpack.c.h.b16 %v193
    %v448 = vunpack.c.l.b16 %v194
    %v449 = vunpack.c.l.b16 %v195
    %v450 = vunpack.c.h.b16 %v195
    %v451 = vunpack.c.l.b16 %v196
    %v452 = vunpack.c.l.b16 %v197
    %v453 = vunpack.c.h.b16 %v197
    %v454 = vunpack.c.l.b16 %v198
    %v455 = vunpack.c.l.b16 %v199
    %v456 = vunpack.c.h.b16 %v199
    %v457 = vunpack.c.l.b16 %v200
    %v458 = vunpack.c.l.b16 %v201
    %v459 = vunpack.c.h.b16 %v201
    %v460 = vunpack.c.l.b16 %v202
    %v461 = vunpack.c.l.b16 %v203
    %v462 = vunpack.c.h.b16 %v203
    %v463 = vunpack.c.l.b16 %v204
    %v464 = vunpack.c.l.b16 %v205
    %v465 = vunpack.c.h.b16 %v205
    %v466 = vunpack.c.l.b16 %v206
    %v467 = vunpack.c.l.b16 %v207
    %v468 = vunpack.c.h.b16 %v207
    %v469 = vunpack.c.l.b16 %v208
    %v470 = vunpack.c.l.b16 %v209
    %v471 = vunpack.c.h.b16 %v209
    %v472 = vunpack.c.l.b16 %v210
    %v473 = vunpack.c.l.b16 %v211
    %v474 = vunpack.c.h.b16 %v211
    %v475 = vunpack.c.l.b16 %v212
    %v476 = vunpack.c.l.b16 %v213
    %v477 = vunpack.c.h.b16 %v213
    %v478 = vunpack.c.l.b16 %v214
    %v479 = vunpack.c.l.b16 %v215
    %v480 = vunpack.c.h.b16 %v215
    %v481 = vunpack.c.l.b16 %v216
    %v482 = vunpack.c.l.b16 %v217
    %v483 = vunpack.c.h.b16 %v217
    %v484 = vunpack.c.l.b16 %v218
    %v485 = vunpack.c.l.b16 %v219
    %v486 = vunpack.c.h.b16 %v219
    %v487 = vunpack.c.l.b16 %v220
    %v488 = vunpack.c.l.b16 %v221
    %v489 = vunpack.c.h.b16 %v221
    %v490 = vunpack.c.l.b16 %v222
    %v491 = vunpack.c.l.b16 %v223
    %v492 = vunpack.c.h.b16 %v223
    %v493 = vunpack.c.l.b16 %v224
    %v494 = vunpack.c.l.b16 %v225
    %v495 = vunpack.c.h.b16 %v225
    %v496 = vunpack.c.l.b16 %v226
    %v497 = vunpack.c.l.b16 %v227
    %v498 = vunpack.c.h.b16 %v227
    %v499 = vunpack.c.l.b16 %v228
    %v500 = vunpack.c.l.b16 %v229
    %v501 = vunpack.c.h.b16 %v229
    %v502 = vunpack.c.l.b16 %v230
    %v503 = vunpack.c.l.b16 %v231
    %v504 = vunpack.c.h.b16 %v231
    %v505 = vunpack.c.l.b16 %v232
    %v506 = vunpack.c.l.b16 %v233
    %v507 = vunpack.c.h.b16 %v233
    %v508 = vunpack.c.l.b16 %v234
    %v509 = vunpack.c.l.b16 %v235
    %v510 = vunpack.c.h.b16 %v235
    %v511 = vunpack.c.l.b16 %v236
    %v512 = vunpack.c.l.b16 %v237
    %v513 = vunpack.c.h.b16 %v237
    %v514 = vunpack.c.l.b16 %v238
    %v515 = vpack.c.b16 %v374, %v371
    %v516 = vpack.c.b16 %v375, %v372
    %v517 = vpack.c.b16 %v376, %v373
    %v518 = vpack.c.b16 %v380, %v377
    %v519 = vpack.c.b16 %v381, %v378
    %v520 = vpack.c.b16 %v382, %v379
    %v521 = vpack.c.b16 %v386, %v383
    %v522 = vpack.c.b16 %v387, %v384
    %v523 = vpack.c.b16 %v388, %v385
    %v524 = vpack.c.b16 %v392, %v389
    %v525 = vpack.c.b16 %v393, %v390
    %v526 = vpack.c.b16 %v394, %v391
    %v527 = vpack.c.b16 %v398, %v395
    %v528 = vpack.c.b16 %v399, %v396
    %v529 = vpack.c.b16 %v400, %v397
    %v530 = vpack.c.b16 %v404, %v401
    %v531 = vpack.c.b16 %v405, %v402
    %v532 = vpack.c.b16 %v406, %v403
    %v533 = vpack.c.b16 %v410, %v407
    %v534 = vpack.c.b16 %v411, %v408
    %v535 = vpack.c.b16 %v412, %v409
    %v536 = vpack.c.b16 %v416, %v413
    %v537 = vpack.c.b16 %v417, %v414
    %v538 = vpack.c.b16 %v418, %v415
    %v539 = vpack.c.b16 %v422, %v419
    %v540 = vpack.c.b16 %v423, %v420
    %v541 = vpack.c.b16 %v424, %v421
    %v542 = vpack.c.b16 %v428, %v425
    %v543 = vpack.c.b16 %v429, %v426
    %v544 = vpack.c.b16 %v430, %v427
    %v545 = vpack.c.b16 %v434, %v431
    %v546 = vpack.c.b16 %v435, %v432
    %v547 = vpack.c.b16 %v436, %v433
    %v548 = vpack.c.b16 %v440, %v437
    %v549 = vpack.c.b16 %v441, %v438
    %v550 = vpack.c.b16 %v442, %v439
    %v551 = vpack.c.b16 %v446, %v443
    %v552 = vpack.c.b16 %v447, %v444
    %v553 = vpack.c.b16 %v448, %v445
    %v554 = vpack.c.b16 %v452, %v449
    %v555 = vpack.c.b16 %v453, %v450
    %v556 = vpack.c.b16 %v454, %v451
    %v557 = vpack.c.b16 %v458, %v455
    %v558 = vpack.c.b16 %v459, %v456
    %v559 = vpack.c.b16 %v460, %v457
    %v560 = vpack.c.b16 %v464, %v461
    %v561 = vpack.c.b16 %v465, %v462
    %v562 = vpack.c.b16 %v466, %v463
    %v563 = vpack.c.b16 %v470, %v467
    %v564 = vpack.c.b16 %v471, %v468
    %v565 = vpack.c.b16 %v472, %v469
    %v566 = vpack.c.b16 %v476, %v473
    %v567 = vpack.c.b16 %v477, %v474
    %v568 = vpack.c.b16 %v478, %v475
    %v569 = vpack.c.b16 %v482, %v479
    %v570 = vpack.c.b16 %v483, %v480
    %v571 = vpack.c.b16 %v484, %v481
    %v572 = vpack.c.b16 %v488, %v485
    %v573 = vpack.c.b16 %v489, %v486
    %v574 = vpack.c.b16 %v490, %v487
    %v575 = vpack.c.b16 %v494, %v491
    %v576 = vpack.c.b16 %v495, %v492
    %v577 = vpack.c.b16 %v496, %v493
    %v578 = vpack.c.b16 %v500, %v497
    %v579 = vpack.c.b16 %v501, %v498
    %v580 = vpack.c.b16 %v502, %v499
    %v581 = vpack.c.b16 %v506, %v503
    %v582 = vpack.c.b16 %v507, %v504
    %v583 = vpack.c.b16 %v508, %v505
    %v584 = vpack.c.b16 %v512, %v509
    %v585 = vpack.c.b16 %v513, %v510
    %v586 = vpack.c.b16 %v514, %v511
    %659 = vmatprep.subr.bf16.mxu0 %v516
    %660 = vmatpush1.bf16.msra.mxu0 %v515
    %661 = vmatprep.subr.bf16.mxu0 %v519
    %662 = vmatpush1.bf16.msra.mxu0 %v518
    %663 = vmatprep.subr.bf16.mxu0 %v522
    %664 = vmatpush1.bf16.msra.mxu0 %v521
    %665 = vmatprep.subr.bf16.mxu0 %v525
    %666 = vmatpush1.bf16.msra.mxu0 %v524
    %667 = vmatprep.subr.bf16.mxu0 %v528
    %668 = vmatpush1.bf16.msra.mxu0 %v527
    %669 = vmatprep.subr.bf16.mxu0 %v531
    %670 = vmatpush1.bf16.msra.mxu0 %v530
    %671 = vmatprep.subr.bf16.mxu0 %v534
    %672 = vmatpush1.bf16.msra.mxu0 %v533
    %673 = vmatprep.subr.bf16.mxu0 %v537
    %674 = vmatpush1.bf16.msra.mxu0 %v536
    %675 = vmatprep.subr.bf16.mxu0 %v540
    %676 = vmatpush1.bf16.msra.mxu0 %v539
    %677 = vmatprep.subr.bf16.mxu0 %v543
    %678 = vmatpush1.bf16.msra.mxu0 %v542
    %679 = vmatprep.subr.bf16.mxu0 %v546
    %680 = vmatpush1.bf16.msra.mxu0 %v545
    %681 = vmatprep.subr.bf16.mxu0 %v549
    %682 = vmatpush1.bf16.msra.mxu0 %v548
    %683 = vmatprep.subr.bf16.mxu0 %v552
    %684 = vmatpush1.bf16.msra.mxu0 %v551
    %685 = vmatprep.subr.bf16.mxu0 %v555
    %686 = vmatpush1.bf16.msra.mxu0 %v554
    %687 = vmatprep.subr.bf16.mxu0 %v558
    %688 = vmatpush1.bf16.msra.mxu0 %v557
    %689 = vmatprep.subr.bf16.mxu0 %v561
    %690 = vmatpush1.bf16.msra.mxu0 %v560
    %691 = vmatprep.mubr.bf16.mxu0 %v240
    %692 = vmatmul.mubr.bf16.gmra.mrb[0].mxu0 %v239
    %v693 = vpop.f32.mrb[0].mxu0
    %v694 = vadd.f32 0.0, %v693
    %v695 = vpop.f32.mrb[0].mxu0
    %v696 = vadd.f32 0.0, %v695
    %v697 = vpop.f32.mrb[0].mxu0
    %v698 = vadd.f32 0.0, %v697
    %v699 = vpop.f32.mrb[0].mxu0
    %v700 = vadd.f32 0.0, %v699
    %701 = vmatprep.mubr.bf16.mxu0 %v242
    %702 = vmatmul.mubr.bf16.gmra.mrb[0].mxu0 %v241
    %v703 = vpop.f32.mrb[0].mxu0
    %v704 = vadd.f32 0.0, %v703
    %v705 = vpop.f32.mrb[0].mxu0
    %v706 = vadd.f32 0.0, %v705
    %v707 = vpop.f32.mrb[0].mxu0
    %v708 = vadd.f32 0.0, %v707
    %v709 = vpop.f32.mrb[0].mxu0
    %v710 = vadd.f32 0.0, %v709
    %711 = vmatprep.mubr.bf16.mxu0 %v244
    %712 = vmatmul.mubr.bf16.gmra.mrb[0].mxu0 %v243
    %v713 = vpop.f32.mrb[0].mxu0
    %v714 = vadd.f32 0.0, %v713
    %v715 = vpop.f32.mrb[0].mxu0
    %v716 = vadd.f32 0.0, %v715
    %v717 = vpop.f32.mrb[0].mxu0
    %v718 = vadd.f32 0.0, %v717
    %v719 = vpop.f32.mrb[0].mxu0
    %v720 = vadd.f32 0.0, %v719
    %721 = vmatprep.mubr.bf16.mxu0 %v246
    %722 = vmatmul.mubr.bf16.gmra.mrb[0].mxu0 %v245
    %v723 = vpop.f32.mrb[0].mxu0
    %v724 = vadd.f32 0.0, %v723
    %v725 = vpop.f32.mrb[0].mxu0
    %v726 = vadd.f32 0.0, %v725
    %v727 = vpop.f32.mrb[0].mxu0
    %v728 = vadd.f32 0.0, %v727
    %v729 = vpop.f32.mrb[0].mxu0
    %v730 = vadd.f32 0.0, %v729
    %731 = vmatprep.mubr.bf16.mxu0 %v249
    %732 = vmatmul.mubr.bf16.gmra.mrb[0].mxu0 %v248
    %v733 = vpop.f32.mrb[0].mxu0
    %v734 = vadd.f32 0.0, %v733
    %v735 = vpop.f32.mrb[0].mxu0
    %v736 = vadd.f32 0.0, %v735
    %v737 = vpop.f32.mrb[0].mxu0
    %v738 = vadd.f32 0.0, %v737
    %v739 = vpop.f32.mrb[0].mxu0
    %v740 = vadd.f32 0.0, %v739
    %741 = vmatprep.mubr.bf16.mxu0 %v251
    %742 = vmatmul.mubr.bf16.gmra.mrb[0].mxu0 %v250
    %v743 = vpop.f32.mrb[0].mxu0
    %v744 = vadd.f32 0.0, %v743
    %v745 = vpop.f32.mrb[0].mxu0
    %v746 = vadd.f32 0.0, %v745
    %v747 = vpop.f32.mrb[0].mxu0
    %v748 = vadd.f32 0.0, %v747
    %v749 = vpop.f32.mrb[0].mxu0
    %v750 = vadd.f32 0.0, %v749
    %751 = vmatprep.mubr.bf16.mxu0 %v253
    %752 = vmatmul.mubr.bf16.gmra.mrb[0].mxu0 %v252
    %v753 = vpop.f32.mrb[0].mxu0
    %v754 = vadd.f32 0.0, %v753
    %v755 = vpop.f32.mrb[0].mxu0
    %v756 = vadd.f32 0.0, %v755
    %v757 = vpop.f32.mrb[0].mxu0
    %v758 = vadd.f32 0.0, %v757
    %v759 = vpop.f32.mrb[0].mxu0
    %v760 = vadd.f32 0.0, %v759
    %761 = vmatprep.mubr.bf16.mxu0 %v255
    %762 = vmatmul.mubr.bf16.gmra.mrb[0].mxu0 %v254
    %v763 = vpop.f32.mrb[0].mxu0
    %v764 = vadd.f32 0.0, %v763
    %v765 = vpop.f32.mrb[0].mxu0
    %v766 = vadd.f32 0.0, %v765
    %v767 = vpop.f32.mrb[0].mxu0
    %v768 = vadd.f32 0.0, %v767
    %v769 = vpop.f32.mrb[0].mxu0
    %v770 = vadd.f32 0.0, %v769
    %771 = vdwg.mxu0
    %772 = vmatprep.subr.bf16.mxu0 %v564
    %773 = vmatpush1.bf16.msra.mxu0 %v563
    %774 = vmatprep.subr.bf16.mxu0 %v567
    %775 = vmatpush1.bf16.msra.mxu0 %v566
    %776 = vmatprep.subr.bf16.mxu0 %v570
    %777 = vmatpush1.bf16.msra.mxu0 %v569
    %778 = vmatprep.subr.bf16.mxu0 %v573
    %779 = vmatpush1.bf16.msra.mxu0 %v572
    %780 = vmatprep.subr.bf16.mxu0 %v576
    %781 = vmatpush1.bf16.msra.mxu0 %v575
    %782 = vmatprep.subr.bf16.mxu0 %v579
    %783 = vmatpush1.bf16.msra.mxu0 %v578
    %784 = vmatprep.subr.bf16.mxu0 %v582
    %785 = vmatpush1.bf16.msra.mxu0 %v581
    %786 = vmatprep.subr.bf16.mxu0 %v585
    %787 = vmatpush1.bf16.msra.mxu0 %v584
    %788 = vmatprep.subr.bf16.mxu0 0
    %789 = vmatpush1.bf16.msra.mxu0 0
    %790 = vmatprep.subr.bf16.mxu0 0
    %791 = vmatpush1.bf16.msra.mxu0 0
    %792 = vmatprep.subr.bf16.mxu0 0
    %793 = vmatpush1.bf16.msra.mxu0 0
    %794 = vmatprep.subr.bf16.mxu0 0
    %795 = vmatpush1.bf16.msra.mxu0 0
    %796 = vmatprep.subr.bf16.mxu0 0
    %797 = vmatpush1.bf16.msra.mxu0 0
    %798 = vmatprep.subr.bf16.mxu0 0
    %799 = vmatpush1.bf16.msra.mxu0 0
    %800 = vmatprep.subr.bf16.mxu0 0
    %801 = vmatpush1.bf16.msra.mxu0 0
    %802 = vmatprep.subr.bf16.mxu0 0
    %803 = vmatpush1.bf16.msra.mxu0 0
    %804 = vmatprep.mubr.bf16.mxu0 0
    %805 = vmatmul.mubr.bf16.gmra.mrb[0].mxu0 %v241
    %v806 = vpop.f32.mrb[0].mxu0
    %v807 = vadd.f32 %v694, %v806
    %v808 = vpop.f32.mrb[0].mxu0
    %v809 = vadd.f32 %v696, %v808
    %v810 = vpop.f32.mrb[0].mxu0
    %v811 = vadd.f32 %v698, %v810
    %v812 = vpop.f32.mrb[0].mxu0
    %v813 = vadd.f32 %v700, %v812
    %814 = vmatprep.mubr.bf16.mxu0 0
    %815 = vmatmul.mubr.bf16.gmra.mrb[0].mxu0 %v243
    %v816 = vpop.f32.mrb[0].mxu0
    %v817 = vadd.f32 %v704, %v816
    %v818 = vpop.f32.mrb[0].mxu0
    %v819 = vadd.f32 %v706, %v818
    %v820 = vpop.f32.mrb[0].mxu0
    %v821 = vadd.f32 %v708, %v820
    %v822 = vpop.f32.mrb[0].mxu0
    %v823 = vadd.f32 %v710, %v822
    %824 = vmatprep.mubr.bf16.mxu0 0
    %825 = vmatmul.mubr.bf16.gmra.mrb[0].mxu0 %v245
    %v826 = vpop.f32.mrb[0].mxu0
    %v827 = vadd.f32 %v714, %v826
    %v828 = vpop.f32.mrb[0].mxu0
    %v829 = vadd.f32 %v716, %v828
    %v830 = vpop.f32.mrb[0].mxu0
    %v831 = vadd.f32 %v718, %v830
    %v832 = vpop.f32.mrb[0].mxu0
    %v833 = vadd.f32 %v720, %v832
    %834 = vmatprep.mubr.bf16.mxu0 0
    %835 = vmatmul.mubr.bf16.gmra.mrb[0].mxu0 %v247
    %v836 = vpop.f32.mrb[0].mxu0
    %v837 = vadd.f32 %v724, %v836
    %v838 = vpop.f32.mrb[0].mxu0
    %v839 = vadd.f32 %v726, %v838
    %v840 = vpop.f32.mrb[0].mxu0
    %v841 = vadd.f32 %v728, %v840
    %v842 = vpop.f32.mrb[0].mxu0
    %v843 = vadd.f32 %v730, %v842
    %844 = vmatprep.mubr.bf16.mxu0 0
    %845 = vmatmul.mubr.bf16.gmra.mrb[0].mxu0 %v250
    %v846 = vpop.f32.mrb[0].mxu0
    %v847 = vadd.f32 %v734, %v846
    %v848 = vpop.f32.mrb[0].mxu0
    %v849 = vadd.f32 %v736, %v848
    %v850 = vpop.f32.mrb[0].mxu0
    %v851 = vadd.f32 %v738, %v850
    %v852 = vpop.f32.mrb[0].mxu0
    %v853 = vadd.f32 %v740, %v852
    %854 = vmatprep.mubr.bf16.mxu0 0
    %855 = vmatmul.mubr.bf16.gmra.mrb[0].mxu0 %v252
    %v856 = vpop.f32.mrb[0].mxu0
    %v857 = vadd.f32 %v744, %v856
    %v858 = vpop.f32.mrb[0].mxu0
    %v859 = vadd.f32 %v746, %v858
    %v860 = vpop.f32.mrb[0].mxu0
    %v861 = vadd.f32 %v748, %v860
    %v862 = vpop.f32.mrb[0].mxu0
    %v863 = vadd.f32 %v750, %v862
    %864 = vmatprep.mubr.bf16.mxu0 0
    %865 = vmatmul.mubr.bf16.gmra.mrb[0].mxu0 %v254
    %v866 = vpop.f32.mrb[0].mxu0
    %v867 = vadd.f32 %v754, %v866
    %v868 = vpop.f32.mrb[0].mxu0
    %v869 = vadd.f32 %v756, %v868
    %v870 = vpop.f32.mrb[0].mxu0
    %v871 = vadd.f32 %v758, %v870
    %v872 = vpop.f32.mrb[0].mxu0
    %v873 = vadd.f32 %v760, %v872
    %874 = vmatprep.mubr.bf16.mxu0 0
    %875 = vmatmul.mubr.bf16.gmra.mrb[0].mxu0 %v256
    %v876 = vpop.f32.mrb[0].mxu0
    %v877 = vadd.f32 %v764, %v876
    %v878 = vpop.f32.mrb[0].mxu0
    %v879 = vadd.f32 %v766, %v878
    %v880 = vpop.f32.mrb[0].mxu0
    %v881 = vadd.f32 %v768, %v880
    %v882 = vpop.f32.mrb[0].mxu0
    %v883 = vadd.f32 %v770, %v882
    %884 = vdwg.mxu0
    %885 = vmatprep.subr.bf16.mxu0 0
    %886 = vmatpush1.bf16.msra.mxu0 %v517
    %887 = vmatprep.subr.bf16.mxu0 0
    %888 = vmatpush1.bf16.msra.mxu0 %v520
    %889 = vmatprep.subr.bf16.mxu0 0
    %890 = vmatpush1.bf16.msra.mxu0 %v523
    %891 = vmatprep.subr.bf16.mxu0 0
    %892 = vmatpush1.bf16.msra.mxu0 %v526
    %893 = vmatprep.subr.bf16.mxu0 0
    %894 = vmatpush1.bf16.msra.mxu0 %v529
    %895 = vmatprep.subr.bf16.mxu0 0
    %896 = vmatpush1.bf16.msra.mxu0 %v532
    %897 = vmatprep.subr.bf16.mxu0 0
    %898 = vmatpush1.bf16.msra.mxu0 %v535
    %899 = vmatprep.subr.bf16.mxu0 0
    %900 = vmatpush1.bf16.msra.mxu0 %v538
    %901 = vmatprep.subr.bf16.mxu0 0
    %902 = vmatpush1.bf16.msra.mxu0 %v541
    %903 = vmatprep.subr.bf16.mxu0 0
    %904 = vmatpush1.bf16.msra.mxu0 %v544
    %905 = vmatprep.subr.bf16.mxu0 0
    %906 = vmatpush1.bf16.msra.mxu0 %v547
    %907 = vmatprep.subr.bf16.mxu0 0
    %908 = vmatpush1.bf16.msra.mxu0 %v550
    %909 = vmatprep.subr.bf16.mxu0 0
    %910 = vmatpush1.bf16.msra.mxu0 %v553
    %911 = vmatprep.subr.bf16.mxu0 0
    %912 = vmatpush1.bf16.msra.mxu0 %v556
    %913 = vmatprep.subr.bf16.mxu0 0
    %914 = vmatpush1.bf16.msra.mxu0 %v559
    %915 = vmatprep.subr.bf16.mxu0 0
    %916 = vmatpush1.bf16.msra.mxu0 %v562
    %917 = vmatprep.mubr.bf16.mxu0 %v240
    %918 = vmatmul.mubr.bf16.gmra.mrb[0].mxu0 %v239
    %v919 = vpop.f32.mrb[0].mxu0
    %v920 = vadd.f32 0.0, %v919
    %v921 = vpop.f32.mrb[0].mxu0
    %v922 = vpop.f32.mrb[0].mxu0
    %v923 = vadd.f32 0.0, %v922
    %v924 = vpop.f32.mrb[0].mxu0
    %925 = vmatprep.mubr.bf16.mxu0 %v242
    %926 = vmatmul.mubr.bf16.gmra.mrb[0].mxu0 %v241
    %v927 = vpop.f32.mrb[0].mxu0
    %v928 = vadd.f32 0.0, %v927
    %v929 = vpop.f32.mrb[0].mxu0
    %v930 = vpop.f32.mrb[0].mxu0
    %v931 = vadd.f32 0.0, %v930
    %v932 = vpop.f32.mrb[0].mxu0
    %933 = vmatprep.mubr.bf16.mxu0 %v244
    %934 = vmatmul.mubr.bf16.gmra.mrb[0].mxu0 %v243
    %v935 = vpop.f32.mrb[0].mxu0
    %v936 = vadd.f32 0.0, %v935
    %v937 = vpop.f32.mrb[0].mxu0
    %v938 = vpop.f32.mrb[0].mxu0
    %v939 = vadd.f32 0.0, %v938
    %v940 = vpop.f32.mrb[0].mxu0
    %941 = vmatprep.mubr.bf16.mxu0 %v246
    %942 = vmatmul.mubr.bf16.gmra.mrb[0].mxu0 %v245
    %v943 = vpop.f32.mrb[0].mxu0
    %v944 = vadd.f32 0.0, %v943
    %v945 = vpop.f32.mrb[0].mxu0
    %v946 = vpop.f32.mrb[0].mxu0
    %v947 = vadd.f32 0.0, %v946
    %v948 = vpop.f32.mrb[0].mxu0
    %949 = vmatprep.mubr.bf16.mxu0 %v249
    %950 = vmatmul.mubr.bf16.gmra.mrb[0].mxu0 %v248
    %v951 = vpop.f32.mrb[0].mxu0
    %v952 = vadd.f32 0.0, %v951
    %v953 = vpop.f32.mrb[0].mxu0
    %v954 = vpop.f32.mrb[0].mxu0
    %v955 = vadd.f32 0.0, %v954
    %v956 = vpop.f32.mrb[0].mxu0
    %957 = vmatprep.mubr.bf16.mxu0 %v251
    %958 = vmatmul.mubr.bf16.gmra.mrb[0].mxu0 %v250
    %v959 = vpop.f32.mrb[0].mxu0
    %v960 = vadd.f32 0.0, %v959
    %v961 = vpop.f32.mrb[0].mxu0
    %v962 = vpop.f32.mrb[0].mxu0
    %v963 = vadd.f32 0.0, %v962
    %v964 = vpop.f32.mrb[0].mxu0
    %965 = vmatprep.mubr.bf16.mxu0 %v253
    %966 = vmatmul.mubr.bf16.gmra.mrb[0].mxu0 %v252
    %v967 = vpop.f32.mrb[0].mxu0
    %v968 = vadd.f32 0.0, %v967
    %v969 = vpop.f32.mrb[0].mxu0
    %v970 = vpop.f32.mrb[0].mxu0
    %v971 = vadd.f32 0.0, %v970
    %v972 = vpop.f32.mrb[0].mxu0
    %973 = vmatprep.mubr.bf16.mxu0 %v255
    %974 = vmatmul.mubr.bf16.gmra.mrb[0].mxu0 %v254
    %v975 = vpop.f32.mrb[0].mxu0
    %v976 = vadd.f32 0.0, %v975
    %v977 = vpop.f32.mrb[0].mxu0
    %v978 = vpop.f32.mrb[0].mxu0
    %v979 = vadd.f32 0.0, %v978
    %v980 = vpop.f32.mrb[0].mxu0
    %981 = vdwg.mxu0
    %982 = vmatprep.subr.bf16.mxu0 0
    %983 = vmatpush1.bf16.msra.mxu0 %v565
    %984 = vmatprep.subr.bf16.mxu0 0
    %985 = vmatpush1.bf16.msra.mxu0 %v568
    %986 = vmatprep.subr.bf16.mxu0 0
    %987 = vmatpush1.bf16.msra.mxu0 %v571
    %988 = vmatprep.subr.bf16.mxu0 0
    %989 = vmatpush1.bf16.msra.mxu0 %v574
    %990 = vmatprep.subr.bf16.mxu0 0
    %991 = vmatpush1.bf16.msra.mxu0 %v577
    %992 = vmatprep.subr.bf16.mxu0 0
    %993 = vmatpush1.bf16.msra.mxu0 %v580
    %994 = vmatprep.subr.bf16.mxu0 0
    %995 = vmatpush1.bf16.msra.mxu0 %v583
    %996 = vmatprep.subr.bf16.mxu0 0
    %997 = vmatpush1.bf16.msra.mxu0 %v586
    %998 = vmatprep.subr.bf16.mxu0 0
    %999 = vmatpush1.bf16.msra.mxu0 0
    %1000 = vmatprep.subr.bf16.mxu0 0
    %1001 = vmatpush1.bf16.msra.mxu0 0
    %1002 = vmatprep.subr.bf16.mxu0 0
    %1003 = vmatpush1.bf16.msra.mxu0 0
    %1004 = vmatprep.subr.bf16.mxu0 0
    %1005 = vmatpush1.bf16.msra.mxu0 0
    %1006 = vmatprep.subr.bf16.mxu0 0
    %1007 = vmatpush1.bf16.msra.mxu0 0
    %1008 = vmatprep.subr.bf16.mxu0 0
    %1009 = vmatpush1.bf16.msra.mxu0 0
    %1010 = vmatprep.subr.bf16.mxu0 0
    %1011 = vmatpush1.bf16.msra.mxu0 0
    %1012 = vmatprep.subr.bf16.mxu0 0
    %1013 = vmatpush1.bf16.msra.mxu0 0
    %1014 = vmatprep.mubr.bf16.mxu0 0
    %1015 = vmatmul.mubr.bf16.gmra.mrb[0].mxu0 %v241
    %v1016 = vpop.f32.mrb[0].mxu0
    %v1017 = vadd.f32 %v920, %v1016
    %v1018 = vpop.f32.mrb[0].mxu0
    %v1019 = vpop.f32.mrb[0].mxu0
    %v1020 = vadd.f32 %v923, %v1019
    %v1021 = vpop.f32.mrb[0].mxu0
    %1022 = vmatprep.mubr.bf16.mxu0 0
    %1023 = vmatmul.mubr.bf16.gmra.mrb[0].mxu0 %v243
    %v1024 = vpop.f32.mrb[0].mxu0
    %v1025 = vadd.f32 %v928, %v1024
    %v1026 = vpop.f32.mrb[0].mxu0
    %v1027 = vpop.f32.mrb[0].mxu0
    %v1028 = vadd.f32 %v931, %v1027
    %v1029 = vpop.f32.mrb[0].mxu0
    %1030 = vmatprep.mubr.bf16.mxu0 0
    %1031 = vmatmul.mubr.bf16.gmra.mrb[0].mxu0 %v245
    %v1032 = vpop.f32.mrb[0].mxu0
    %v1033 = vadd.f32 %v936, %v1032
    %v1034 = vpop.f32.mrb[0].mxu0
    %v1035 = vpop.f32.mrb[0].mxu0
    %v1036 = vadd.f32 %v939, %v1035
    %v1037 = vpop.f32.mrb[0].mxu0
    %1038 = vmatprep.mubr.bf16.mxu0 0
    %1039 = vmatmul.mubr.bf16.gmra.mrb[0].mxu0 %v247
    %v1040 = vpop.f32.mrb[0].mxu0
    %v1041 = vadd.f32 %v944, %v1040
    %v1042 = vpop.f32.mrb[0].mxu0
    %v1043 = vpop.f32.mrb[0].mxu0
    %v1044 = vadd.f32 %v947, %v1043
    %v1045 = vpop.f32.mrb[0].mxu0
    %1046 = vmatprep.mubr.bf16.mxu0 0
    %1047 = vmatmul.mubr.bf16.gmra.mrb[0].mxu0 %v250
    %v1048 = vpop.f32.mrb[0].mxu0
    %v1049 = vadd.f32 %v952, %v1048
    %v1050 = vpop.f32.mrb[0].mxu0
    %v1051 = vpop.f32.mrb[0].mxu0
    %v1052 = vadd.f32 %v955, %v1051
    %v1053 = vpop.f32.mrb[0].mxu0
    %1054 = vmatprep.mubr.bf16.mxu0 0
    %1055 = vmatmul.mubr.bf16.gmra.mrb[0].mxu0 %v252
    %v1056 = vpop.f32.mrb[0].mxu0
    %v1057 = vadd.f32 %v960, %v1056
    %v1058 = vpop.f32.mrb[0].mxu0
    %v1059 = vpop.f32.mrb[0].mxu0
    %v1060 = vadd.f32 %v963, %v1059
    %v1061 = vpop.f32.mrb[0].mxu0
    %1062 = vmatprep.mubr.bf16.mxu0 0
    %1063 = vmatmul.mubr.bf16.gmra.mrb[0].mxu0 %v254
    %v1064 = vpop.f32.mrb[0].mxu0
    %v1065 = vadd.f32 %v968, %v1064
    %v1066 = vpop.f32.mrb[0].mxu0
    %v1067 = vpop.f32.mrb[0].mxu0
    %v1068 = vadd.f32 %v971, %v1067
    %v1069 = vpop.f32.mrb[0].mxu0
    %1070 = vmatprep.mubr.bf16.mxu0 0
    %1071 = vmatmul.mubr.bf16.gmra.mrb[0].mxu0 %v256
    %v1072 = vpop.f32.mrb[0].mxu0
    %v1073 = vadd.f32 %v976, %v1072
    %v1074 = vpop.f32.mrb[0].mxu0
    %v1075 = vpop.f32.mrb[0].mxu0
    %v1076 = vadd.f32 %v979, %v1075
    %v1077 = vpop.f32.mrb[0].mxu0
    %1078 = vdwg.mxu0
    %v1079 = vrot.slane %v807, 7
    %v1080 = vrot.slane %v811, 7
    %v1081 = vrot.slane %v817, 7
    %v1082 = vrot.slane %v821, 7
    %v1083 = vrot.slane %v827, 7
    %v1084 = vrot.slane %v831, 7
    %v1085 = vrot.slane %v837, 7
    %v1086 = vrot.slane %v841, 7
    %v1087 = vrot.slane %v847, 7
    %v1088 = vrot.slane %v851, 7
    %v1089 = vrot.slane %v857, 7
    %v1090 = vrot.slane %v861, 7
    %v1091 = vrot.slane %v867, 7
    %v1092 = vrot.slane %v871, 7
    %v1093 = vrot.slane %v877, 7
    %v1094 = vrot.slane %v881, 7
    %v1095 = vmul.f32 %v105, %v1079
    %v1096 = vmul.f32 %v105, %v1080
    %v1097 = vmul.f32 %v105, %v1081
    %v1098 = vmul.f32 %v105, %v1082
    %v1099 = vmul.f32 %v105, %v1083
    %v1100 = vmul.f32 %v105, %v1084
    %v1101 = vmul.f32 %v105, %v1085
    %v1102 = vmul.f32 %v105, %v1086
    %v1103 = vmul.f32 %v105, %v1087
    %v1104 = vmul.f32 %v105, %v1088
    %v1105 = vmul.f32 %v105, %v1089
    %v1106 = vmul.f32 %v105, %v1090
    %v1107 = vmul.f32 %v105, %v1091
    %v1108 = vmul.f32 %v105, %v1092
    %v1109 = vmul.f32 %v105, %v1093
    %v1110 = vmul.f32 %v105, %v1094
    %v1111 = vadd.f32 %v809, %v1095
    %v1112 = vadd.f32 %v813, %v1096
    %v1113 = vadd.f32 %v819, %v1097
    %v1114 = vadd.f32 %v823, %v1098
    %v1115 = vadd.f32 %v829, %v1099
    %v1116 = vadd.f32 %v833, %v1100
    %v1117 = vadd.f32 %v839, %v1101
    %v1118 = vadd.f32 %v843, %v1102
    %v1119 = vadd.f32 %v849, %v1103
    %v1120 = vadd.f32 %v853, %v1104
    %v1121 = vadd.f32 %v859, %v1105
    %v1122 = vadd.f32 %v863, %v1106
    %v1123 = vadd.f32 %v869, %v1107
    %v1124 = vadd.f32 %v873, %v1108
    %v1125 = vadd.f32 %v879, %v1109
    %v1126 = vadd.f32 %v883, %v1110
    %v1127 = vrot.slane %v1017, 1
    %v1128 = vrot.slane %v1020, 1
    %v1129 = vrot.slane %v1025, 1
    %v1130 = vrot.slane %v1028, 1
    %v1131 = vrot.slane %v1033, 1
    %v1132 = vrot.slane %v1036, 1
    %v1133 = vrot.slane %v1041, 1
    %v1134 = vrot.slane %v1044, 1
    %v1135 = vrot.slane %v1049, 1
    %v1136 = vrot.slane %v1052, 1
    %v1137 = vrot.slane %v1057, 1
    %v1138 = vrot.slane %v1060, 1
    %v1139 = vrot.slane %v1065, 1
    %v1140 = vrot.slane %v1068, 1
    %v1141 = vrot.slane %v1073, 1
    %v1142 = vrot.slane %v1076, 1
    %v1143 = vmul.f32 %v108, %v1127
    %v1144 = vmul.f32 %v108, %v1128
    %v1145 = vmul.f32 %v108, %v1129
    %v1146 = vmul.f32 %v108, %v1130
    %v1147 = vmul.f32 %v108, %v1131
    %v1148 = vmul.f32 %v108, %v1132
    %v1149 = vmul.f32 %v108, %v1133
    %v1150 = vmul.f32 %v108, %v1134
    %v1151 = vmul.f32 %v108, %v1135
    %v1152 = vmul.f32 %v108, %v1136
    %v1153 = vmul.f32 %v108, %v1137
    %v1154 = vmul.f32 %v108, %v1138
    %v1155 = vmul.f32 %v108, %v1139
    %v1156 = vmul.f32 %v108, %v1140
    %v1157 = vmul.f32 %v108, %v1141
    %v1158 = vmul.f32 %v108, %v1142
    %v1159 = vadd.f32 %v1111, %v1143
    %v1160 = vadd.f32 %v1112, %v1144
    %v1161 = vadd.f32 %v1113, %v1145
    %v1162 = vadd.f32 %v1114, %v1146
    %v1163 = vadd.f32 %v1115, %v1147
    %v1164 = vadd.f32 %v1116, %v1148
    %v1165 = vadd.f32 %v1117, %v1149
    %v1166 = vadd.f32 %v1118, %v1150
    %v1167 = vadd.f32 %v1119, %v1151
    %v1168 = vadd.f32 %v1120, %v1152
    %v1169 = vadd.f32 %v1121, %v1153
    %v1170 = vadd.f32 %v1122, %v1154
    %v1171 = vadd.f32 %v1123, %v1155
    %v1172 = vadd.f32 %v1124, %v1156
    %v1173 = vadd.f32 %v1125, %v1157
    %v1174 = vadd.f32 %v1126, %v1158
    %v1175 = vld [vmem:[%s3] sm:$0x1]
    %v1176 = vld [vmem:[%s4] sm:$0x1]
    %v1177 = vadd.f32 %v1159, %v1160
    %v1178 = vadd.f32 %v1177, %v1161
    %v1179 = vadd.f32 %v1178, %v1162
    %v1180 = vadd.f32 %v1179, %v1163
    %v1181 = vadd.f32 %v1180, %v1164
    %v1182 = vadd.f32 %v1181, %v1165
    %v1183 = vadd.f32 %v1182, %v1166
    %v1184 = vadd.f32 %v1183, %v1167
    %v1185 = vadd.f32 %v1184, %v1168
    %v1186 = vadd.f32 %v1185, %v1169
    %v1187 = vadd.f32 %v1186, %v1170
    %v1188 = vadd.f32 %v1187, %v1171
    %v1189 = vadd.f32 %v1188, %v1172
    %v1190 = vadd.f32 %v1189, %v1173
    %v1191 = vadd.f32 %v1190, %v1174
    %v1192 = vrot.slane %v1191, 4
    %v1193 = vadd.f32 %v1191, %v1192
    %v1194 = vrot.slane %v1193, 2
    %v1195 = vadd.f32 %v1193, %v1194
    %v1196 = vrot.slane %v1195, 1
    %v1197 = vadd.f32 %v1195, %v1196
    %v1198 = vmul.f32 %v1197, 0.0078125
    %v1199 = vmul.f32 %v1159, %v1159
    %v1200 = vmul.f32 %v1160, %v1160
    %v1201 = vmul.f32 %v1161, %v1161
    %v1202 = vmul.f32 %v1162, %v1162
    %v1203 = vmul.f32 %v1163, %v1163
    %v1204 = vmul.f32 %v1164, %v1164
    %v1205 = vmul.f32 %v1165, %v1165
    %v1206 = vmul.f32 %v1166, %v1166
    %v1207 = vmul.f32 %v1167, %v1167
    %v1208 = vmul.f32 %v1168, %v1168
    %v1209 = vmul.f32 %v1169, %v1169
    %v1210 = vmul.f32 %v1170, %v1170
    %v1211 = vmul.f32 %v1171, %v1171
    %v1212 = vmul.f32 %v1172, %v1172
    %v1213 = vmul.f32 %v1173, %v1173
    %v1214 = vmul.f32 %v1174, %v1174
    %v1215 = vadd.f32 %v1199, %v1200
    %v1216 = vadd.f32 %v1215, %v1201
    %v1217 = vadd.f32 %v1216, %v1202
    %v1218 = vadd.f32 %v1217, %v1203
    %v1219 = vadd.f32 %v1218, %v1204
    %v1220 = vadd.f32 %v1219, %v1205
    %v1221 = vadd.f32 %v1220, %v1206
    %v1222 = vadd.f32 %v1221, %v1207
    %v1223 = vadd.f32 %v1222, %v1208
    %v1224 = vadd.f32 %v1223, %v1209
    %v1225 = vadd.f32 %v1224, %v1210
    %v1226 = vadd.f32 %v1225, %v1211
    %v1227 = vadd.f32 %v1226, %v1212
    %v1228 = vadd.f32 %v1227, %v1213
    %v1229 = vadd.f32 %v1228, %v1214
    %v1230 = vrot.slane %v1229, 4
    %v1231 = vadd.f32 %v1229, %v1230
    %v1232 = vrot.slane %v1231, 2
    %v1233 = vadd.f32 %v1231, %v1232
    %v1234 = vrot.slane %v1233, 1
    %v1235 = vadd.f32 %v1233, %v1234
    %v1236 = vmul.f32 %v1235, 0.0078125
    %v1237 = vmul.f32 %v1198, %v1198
    %v1238 = vsub.f32 %v1236, %v1237
    %v1239 = vadd.f32 %v1238, 1e-05
    %v1240 = vrsqrt.pop %v1239
    %v1241 = vmul.f32 %v1175, %v1240
    %v1242 = vmul.f32 %v1198, %v1241
    %v1243 = vsub.f32 %v1176, %v1242
    %v1245 = vlaneseq
    %v1246 = vshrl.u32 %v1245, 7
    %v1247 = vsub.s32 0, %v1246
    %v1248 = vrot.slane %v1241, %v1247
    %v1250 = vmul.f32 %v1159, %v1248
    %v1251 = vmul.f32 %v1160, %v1248
    %v1252 = vmul.f32 %v1161, %v1248
    %v1253 = vmul.f32 %v1162, %v1248
    %v1254 = vmul.f32 %v1163, %v1248
    %v1255 = vmul.f32 %v1164, %v1248
    %v1256 = vmul.f32 %v1165, %v1248
    %v1257 = vmul.f32 %v1166, %v1248
    %v1258 = vmul.f32 %v1167, %v1248
    %v1259 = vmul.f32 %v1168, %v1248
    %v1260 = vmul.f32 %v1169, %v1248
    %v1261 = vmul.f32 %v1170, %v1248
    %v1262 = vmul.f32 %v1171, %v1248
    %v1263 = vmul.f32 %v1172, %v1248
    %v1264 = vmul.f32 %v1173, %v1248
    %v1265 = vmul.f32 %v1174, %v1248
    %v1267 = vlaneseq
    %v1268 = vshrl.u32 %v1267, 7
    %v1269 = vsub.s32 0, %v1268
    %v1270 = vrot.slane %v1243, %v1269
    %v1272 = vadd.f32 %v1250, %v1270
    %v1273 = vadd.f32 %v1251, %v1270
    %v1274 = vadd.f32 %v1252, %v1270
    %v1275 = vadd.f32 %v1253, %v1270
    %v1276 = vadd.f32 %v1254, %v1270
    %v1277 = vadd.f32 %v1255, %v1270
    %v1278 = vadd.f32 %v1256, %v1270
    %v1279 = vadd.f32 %v1257, %v1270
    %v1280 = vadd.f32 %v1258, %v1270
    %v1281 = vadd.f32 %v1259, %v1270
    %v1282 = vadd.f32 %v1260, %v1270
    %v1283 = vadd.f32 %v1261, %v1270
    %v1284 = vadd.f32 %v1262, %v1270
    %v1285 = vadd.f32 %v1263, %v1270
    %v1286 = vadd.f32 %v1264, %v1270
    %v1287 = vadd.f32 %v1265, %v1270
    %v1288 = vmax.f32 %v1272, 0.0
    %v1289 = vmax.f32 %v1273, 0.0
    %v1290 = vmax.f32 %v1274, 0.0
    %v1291 = vmax.f32 %v1275, 0.0
    %v1292 = vmax.f32 %v1276, 0.0
    %v1293 = vmax.f32 %v1277, 0.0
    %v1294 = vmax.f32 %v1278, 0.0
    %v1295 = vmax.f32 %v1279, 0.0
    %v1296 = vmax.f32 %v1280, 0.0
    %v1297 = vmax.f32 %v1281, 0.0
    %v1298 = vmax.f32 %v1282, 0.0
    %v1299 = vmax.f32 %v1283, 0.0
    %v1300 = vmax.f32 %v1284, 0.0
    %v1301 = vmax.f32 %v1285, 0.0
    %v1302 = vmax.f32 %v1286, 0.0
    %v1303 = vmax.f32 %v1287, 0.0
    %v1304 = vpack.c.bf16 %v1289, %v1288
    %v1305 = vpack.c.bf16 %v1291, %v1290
    %v1306 = vpack.c.bf16 %v1293, %v1292
    %v1307 = vpack.c.bf16 %v1295, %v1294
    %v1308 = vpack.c.bf16 %v1297, %v1296
    %v1309 = vpack.c.bf16 %v1299, %v1298
    %v1310 = vpack.c.bf16 %v1301, %v1300
    %v1311 = vpack.c.bf16 %v1303, %v1302
    %v1320 = vunpack.c.l.b16 %v1304
    %v1321 = vunpack.c.h.b16 %v1304
    %v1322 = vunpack.c.l.b16 %v1305
    %v1323 = vunpack.c.h.b16 %v1305
    %v1324 = vunpack.c.l.b16 %v1306
    %v1325 = vunpack.c.h.b16 %v1306
    %v1326 = vunpack.c.l.b16 %v1307
    %v1327 = vunpack.c.h.b16 %v1307
    %v1328 = vunpack.c.l.b16 %v1308
    %v1329 = vunpack.c.h.b16 %v1308
    %v1330 = vunpack.c.l.b16 %v1309
    %v1331 = vunpack.c.h.b16 %v1309
    %v1332 = vunpack.c.l.b16 %v1310
    %v1333 = vunpack.c.h.b16 %v1310
    %v1334 = vunpack.c.l.b16 %v1311
    %v1335 = vunpack.c.h.b16 %v1311
    %v1336 = vld [vmem:[#allocation7] sm:$0xff]
    %v1337 = vld [vmem:[#allocation7 + $0x8] sm:$0xf]
    %v1338 = vld [vmem:[#allocation7 + $0xc] sm:$0xff]
    %v1339 = vld [vmem:[#allocation7 + $0x14] sm:$0xf]
    %v1340 = vld [vmem:[#allocation7 + $0x18] sm:$0xff]
    %v1341 = vld [vmem:[#allocation7 + $0x20] sm:$0xf]
    %v1342 = vld [vmem:[#allocation7 + $0x24] sm:$0xff]
    %v1343 = vld [vmem:[#allocation7 + $0x2c] sm:$0xf]
    %v1344 = vld [vmem:[#allocation7 + $0x30] sm:$0xff]
    %v1345 = vld [vmem:[#allocation7 + $0x38] sm:$0xf]
    %v1346 = vld [vmem:[#allocation7 + $0x3c] sm:$0xff]
    %v1347 = vld [vmem:[#allocation7 + $0x44] sm:$0xf]
    %v1348 = vld [vmem:[#allocation7 + $0x48] sm:$0xff]
    %v1349 = vld [vmem:[#allocation7 + $0x50] sm:$0xf]
    %v1350 = vld [vmem:[#allocation7 + $0x54] sm:$0xff]
    %v1351 = vld [vmem:[#allocation7 + $0x5c] sm:$0xf]
    %v1352 = vld [vmem:[#allocation7 + $0x60] sm:$0xff]
    %v1353 = vld [vmem:[#allocation7 + $0x68] sm:$0xf]
    %v1354 = vld [vmem:[#allocation7 + $0x6c] sm:$0xff]
    %v1355 = vld [vmem:[#allocation7 + $0x74] sm:$0xf]
    %v1356 = vld [vmem:[#allocation7 + $0x78] sm:$0xff]
    %v1357 = vld [vmem:[#allocation7 + $0x80] sm:$0xf]
    %v1358 = vld [vmem:[#allocation7 + $0x84] sm:$0xff]
    %v1359 = vld [vmem:[#allocation7 + $0x8c] sm:$0xf]
    %v1360 = vld [vmem:[#allocation7 + $0x90] sm:$0xff]
    %v1361 = vld [vmem:[#allocation7 + $0x98] sm:$0xf]
    %v1362 = vld [vmem:[#allocation7 + $0x9c] sm:$0xff]
    %v1363 = vld [vmem:[#allocation7 + $0xa4] sm:$0xf]
    %v1364 = vld [vmem:[#allocation7 + $0xa8] sm:$0xff]
    %v1365 = vld [vmem:[#allocation7 + $0xb0] sm:$0xf]
    %v1366 = vld [vmem:[#allocation7 + $0xb4] sm:$0xff]
    %v1367 = vld [vmem:[#allocation7 + $0xbc] sm:$0xf]
    %v1368 = vld [vmem:[#allocation7 + $0xc0] sm:$0xff]
    %v1369 = vld [vmem:[#allocation7 + $0xc8] sm:$0xf]
    %v1370 = vld [vmem:[#allocation7 + $0xcc] sm:$0xff]
    %v1371 = vld [vmem:[#allocation7 + $0xd4] sm:$0xf]
    %v1372 = vld [vmem:[#allocation7 + $0xd8] sm:$0xff]
    %v1373 = vld [vmem:[#allocation7 + $0xe0] sm:$0xf]
    %v1374 = vld [vmem:[#allocation7 + $0xe4] sm:$0xff]
    %v1375 = vld [vmem:[#allocation7 + $0xec] sm:$0xf]
    %v1376 = vld [vmem:[#allocation7 + $0xf0] sm:$0xff]
    %v1377 = vld [vmem:[#allocation7 + $0xf8] sm:$0xf]
    %v1378 = vld [vmem:[#allocation7 + $0xfc] sm:$0xff]
    %v1379 = vld [vmem:[#allocation7 + $0x104] sm:$0xf]
    %v1380 = vld [vmem:[#allocation7 + $0x108] sm:$0xff]
    %v1381 = vld [vmem:[#allocation7 + $0x110] sm:$0xf]
    %v1382 = vld [vmem:[#allocation7 + $0x114] sm:$0xff]
    %v1383 = vld [vmem:[#allocation7 + $0x11c] sm:$0xf]
    %v1384 = vld [vmem:[#allocation7 + $0x120] sm:$0xff]
    %v1385 = vld [vmem:[#allocation7 + $0x128] sm:$0xf]
    %v1386 = vld [vmem:[#allocation7 + $0x12c] sm:$0xff]
    %v1387 = vld [vmem:[#allocation7 + $0x134] sm:$0xf]
    %v1388 = vld [vmem:[#allocation7 + $0x138] sm:$0xff]
    %v1389 = vld [vmem:[#allocation7 + $0x140] sm:$0xf]
    %v1390 = vld [vmem:[#allocation7 + $0x144] sm:$0xff]
    %v1391 = vld [vmem:[#allocation7 + $0x14c] sm:$0xf]
    %v1392 = vld [vmem:[#allocation7 + $0x150] sm:$0xff]
    %v1393 = vld [vmem:[#allocation7 + $0x158] sm:$0xf]
    %v1394 = vld [vmem:[#allocation7 + $0x15c] sm:$0xff]
    %v1395 = vld [vmem:[#allocation7 + $0x164] sm:$0xf]
    %v1396 = vld [vmem:[#allocation7 + $0x168] sm:$0xff]
    %v1397 = vld [vmem:[#allocation7 + $0x170] sm:$0xf]
    %v1398 = vld [vmem:[#allocation7 + $0x174] sm:$0xff]
    %v1399 = vld [vmem:[#allocation7 + $0x17c] sm:$0xf]
    %v1400 = vld [vmem:[#allocation7 + $0x180] sm:$0xff]
    %v1401 = vld [vmem:[#allocation7 + $0x188] sm:$0xf]
    %v1402 = vld [vmem:[#allocation7 + $0x18c] sm:$0xff]
    %v1403 = vld [vmem:[#allocation7 + $0x194] sm:$0xf]
    %v1404 = vld [vmem:[#allocation7 + $0x198] sm:$0xff]
    %v1405 = vld [vmem:[#allocation7 + $0x1a0] sm:$0xf]
    %v1406 = vld [vmem:[#allocation7 + $0x1a4] sm:$0xff]
    %v1407 = vld [vmem:[#allocation7 + $0x1ac] sm:$0xf]
    %v1408 = vld [vmem:[#allocation7 + $0x1b0] sm:$0xff]
    %v1409 = vld [vmem:[#allocation7 + $0x1b8] sm:$0xf]
    %v1410 = vld [vmem:[#allocation7 + $0x1bc] sm:$0xff]
    %v1411 = vld [vmem:[#allocation7 + $0x1c4] sm:$0xf]
    %v1412 = vld [vmem:[#allocation7 + $0x1c8] sm:$0xff]
    %v1413 = vld [vmem:[#allocation7 + $0x1d0] sm:$0xf]
    %v1414 = vld [vmem:[#allocation7 + $0x1d4] sm:$0xff]
    %v1415 = vld [vmem:[#allocation7 + $0x1dc] sm:$0xf]
    %v1416 = vld [vmem:[#allocation7 + $0x1e0] sm:$0xff]
    %v1417 = vld [vmem:[#allocation7 + $0x1e8] sm:$0xf]
    %v1418 = vld [vmem:[#allocation7 + $0x1ec] sm:$0xff]
    %v1419 = vld [vmem:[#allocation7 + $0x1f4] sm:$0xf]
    %v1420 = vld [vmem:[#allocation7 + $0x1f8] sm:$0xff]
    %v1421 = vld [vmem:[#allocation7 + $0x200] sm:$0xf]
    %v1422 = vld [vmem:[#allocation7 + $0x204] sm:$0xff]
    %v1423 = vld [vmem:[#allocation7 + $0x20c] sm:$0xf]
    %v1424 = vld [vmem:[#allocation7 + $0x210] sm:$0xff]
    %v1425 = vld [vmem:[#allocation7 + $0x218] sm:$0xf]
    %v1426 = vld [vmem:[#allocation7 + $0x21c] sm:$0xff]
    %v1427 = vld [vmem:[#allocation7 + $0x224] sm:$0xf]
    %v1428 = vld [vmem:[#allocation7 + $0x228] sm:$0xff]
    %v1429 = vld [vmem:[#allocation7 + $0x230] sm:$0xf]
    %v1430 = vld [vmem:[#allocation7 + $0x234] sm:$0xff]
    %v1431 = vld [vmem:[#allocation7 + $0x23c] sm:$0xf]
    %v1432 = vpack.c.b16 %v1320, %v126
    %v1433 = vpack.c.b16 %v1321, %v1320
    %v1434 = vpack.c.b16 %v1322, %v1321
    %v1435 = vpack.c.b16 %v1323, %v1322
    %v1436 = vpack.c.b16 %v1324, %v1323
    %v1437 = vpack.c.b16 %v1325, %v1324
    %v1438 = vpack.c.b16 %v1326, %v1325
    %v1439 = vpack.c.b16 %v1327, %v1326
    %v1440 = vpack.c.b16 %v126, %v1327
    %v1441 = vpack.c.b16 %v1328, %v126
    %v1442 = vpack.c.b16 %v1329, %v1328
    %v1443 = vpack.c.b16 %v1330, %v1329
    %v1444 = vpack.c.b16 %v1331, %v1330
    %v1445 = vpack.c.b16 %v1332, %v1331
    %v1446 = vpack.c.b16 %v1333, %v1332
    %v1447 = vpack.c.b16 %v1334, %v1333
    %v1448 = vpack.c.b16 %v1335, %v1334
    %v1449 = vpack.c.b16 %v126, %v1335
    %v1564 = vunpack.c.l.b16 %v1336
    %v1565 = vunpack.c.h.b16 %v1336
    %v1566 = vunpack.c.l.b16 %v1337
    %v1567 = vunpack.c.l.b16 %v1338
    %v1568 = vunpack.c.h.b16 %v1338
    %v1569 = vunpack.c.l.b16 %v1339
    %v1570 = vunpack.c.l.b16 %v1340
    %v1571 = vunpack.c.h.b16 %v1340
    %v1572 = vunpack.c.l.b16 %v1341
    %v1573 = vunpack.c.l.b16 %v1342
    %v1574 = vunpack.c.h.b16 %v1342
    %v1575 = vunpack.c.l.b16 %v1343
    %v1576 = vunpack.c.l.b16 %v1344
    %v1577 = vunpack.c.h.b16 %v1344
    %v1578 = vunpack.c.l.b16 %v1345
    %v1579 = vunpack.c.l.b16 %v1346
    %v1580 = vunpack.c.h.b16 %v1346
    %v1581 = vunpack.c.l.b16 %v1347
    %v1582 = vunpack.c.l.b16 %v1348
    %v1583 = vunpack.c.h.b16 %v1348
    %v1584 = vunpack.c.l.b16 %v1349
    %v1585 = vunpack.c.l.b16 %v1350
    %v1586 = vunpack.c.h.b16 %v1350
    %v1587 = vunpack.c.l.b16 %v1351
    %v1588 = vunpack.c.l.b16 %v1352
    %v1589 = vunpack.c.h.b16 %v1352
    %v1590 = vunpack.c.l.b16 %v1353
    %v1591 = vunpack.c.l.b16 %v1354
    %v1592 = vunpack.c.h.b16 %v1354
    %v1593 = vunpack.c.l.b16 %v1355
    %v1594 = vunpack.c.l.b16 %v1356
    %v1595 = vunpack.c.h.b16 %v1356
    %v1596 = vunpack.c.l.b16 %v1357
    %v1597 = vunpack.c.l.b16 %v1358
    %v1598 = vunpack.c.h.b16 %v1358
    %v1599 = vunpack.c.l.b16 %v1359
    %v1600 = vunpack.c.l.b16 %v1360
    %v1601 = vunpack.c.h.b16 %v1360
    %v1602 = vunpack.c.l.b16 %v1361
    %v1603 = vunpack.c.l.b16 %v1362
    %v1604 = vunpack.c.h.b16 %v1362
    %v1605 = vunpack.c.l.b16 %v1363
    %v1606 = vunpack.c.l.b16 %v1364
    %v1607 = vunpack.c.h.b16 %v1364
    %v1608 = vunpack.c.l.b16 %v1365
    %v1609 = vunpack.c.l.b16 %v1366
    %v1610 = vunpack.c.h.b16 %v1366
    %v1611 = vunpack.c.l.b16 %v1367
    %v1612 = vunpack.c.l.b16 %v1368
    %v1613 = vunpack.c.h.b16 %v1368
    %v1614 = vunpack.c.l.b16 %v1369
    %v1615 = vunpack.c.l.b16 %v1370
    %v1616 = vunpack.c.h.b16 %v1370
    %v1617 = vunpack.c.l.b16 %v1371
    %v1618 = vunpack.c.l.b16 %v1372
    %v1619 = vunpack.c.h.b16 %v1372
    %v1620 = vunpack.c.l.b16 %v1373
    %v1621 = vunpack.c.l.b16 %v1374
    %v1622 = vunpack.c.h.b16 %v1374
    %v1623 = vunpack.c.l.b16 %v1375
    %v1624 = vunpack.c.l.b16 %v1376
    %v1625 = vunpack.c.h.b16 %v1376
    %v1626 = vunpack.c.l.b16 %v1377
    %v1627 = vunpack.c.l.b16 %v1378
    %v1628 = vunpack.c.h.b16 %v1378
    %v1629 = vunpack.c.l.b16 %v1379
    %v1630 = vunpack.c.l.b16 %v1380
    %v1631 = vunpack.c.h.b16 %v1380
    %v1632 = vunpack.c.l.b16 %v1381
    %v1633 = vunpack.c.l.b16 %v1382
    %v1634 = vunpack.c.h.b16 %v1382
    %v1635 = vunpack.c.l.b16 %v1383
    %v1636 = vunpack.c.l.b16 %v1384
    %v1637 = vunpack.c.h.b16 %v1384
    %v1638 = vunpack.c.l.b16 %v1385
    %v1639 = vunpack.c.l.b16 %v1386
    %v1640 = vunpack.c.h.b16 %v1386
    %v1641 = vunpack.c.l.b16 %v1387
    %v1642 = vunpack.c.l.b16 %v1388
    %v1643 = vunpack.c.h.b16 %v1388
    %v1644 = vunpack.c.l.b16 %v1389
    %v1645 = vunpack.c.l.b16 %v1390
    %v1646 = vunpack.c.h.b16 %v1390
    %v1647 = vunpack.c.l.b16 %v1391
    %v1648 = vunpack.c.l.b16 %v1392
    %v1649 = vunpack.c.h.b16 %v1392
    %v1650 = vunpack.c.l.b16 %v1393
    %v1651 = vunpack.c.l.b16 %v1394
    %v1652 = vunpack.c.h.b16 %v1394
    %v1653 = vunpack.c.l.b16 %v1395
    %v1654 = vunpack.c.l.b16 %v1396
    %v1655 = vunpack.c.h.b16 %v1396
    %v1656 = vunpack.c.l.b16 %v1397
    %v1657 = vunpack.c.l.b16 %v1398
    %v1658 = vunpack.c.h.b16 %v1398
    %v1659 = vunpack.c.l.b16 %v1399
    %v1660 = vunpack.c.l.b16 %v1400
    %v1661 = vunpack.c.h.b16 %v1400
    %v1662 = vunpack.c.l.b16 %v1401
    %v1663 = vunpack.c.l.b16 %v1402
    %v1664 = vunpack.c.h.b16 %v1402
    %v1665 = vunpack.c.l.b16 %v1403
    %v1666 = vunpack.c.l.b16 %v1404
    %v1667 = vunpack.c.h.b16 %v1404
    %v1668 = vunpack.c.l.b16 %v1405
    %v1669 = vunpack.c.l.b16 %v1406
    %v1670 = vunpack.c.h.b16 %v1406
    %v1671 = vunpack.c.l.b16 %v1407
    %v1672 = vunpack.c.l.b16 %v1408
    %v1673 = vunpack.c.h.b16 %v1408
    %v1674 = vunpack.c.l.b16 %v1409
    %v1675 = vunpack.c.l.b16 %v1410
    %v1676 = vunpack.c.h.b16 %v1410
    %v1677 = vunpack.c.l.b16 %v1411
    %v1678 = vunpack.c.l.b16 %v1412
    %v1679 = vunpack.c.h.b16 %v1412
    %v1680 = vunpack.c.l.b16 %v1413
    %v1681 = vunpack.c.l.b16 %v1414
    %v1682 = vunpack.c.h.b16 %v1414
    %v1683 = vunpack.c.l.b16 %v1415
    %v1684 = vunpack.c.l.b16 %v1416
    %v1685 = vunpack.c.h.b16 %v1416
    %v1686 = vunpack.c.l.b16 %v1417
    %v1687 = vunpack.c.l.b16 %v1418
    %v1688 = vunpack.c.h.b16 %v1418
    %v1689 = vunpack.c.l.b16 %v1419
    %v1690 = vunpack.c.l.b16 %v1420
    %v1691 = vunpack.c.h.b16 %v1420
    %v1692 = vunpack.c.l.b16 %v1421
    %v1693 = vunpack.c.l.b16 %v1422
    %v1694 = vunpack.c.h.b16 %v1422
    %v1695 = vunpack.c.l.b16 %v1423
    %v1696 = vunpack.c.l.b16 %v1424
    %v1697 = vunpack.c.h.b16 %v1424
    %v1698 = vunpack.c.l.b16 %v1425
    %v1699 = vunpack.c.l.b16 %v1426
    %v1700 = vunpack.c.h.b16 %v1426
    %v1701 = vunpack.c.l.b16 %v1427
    %v1702 = vunpack.c.l.b16 %v1428
    %v1703 = vunpack.c.h.b16 %v1428
    %v1704 = vunpack.c.l.b16 %v1429
    %v1705 = vunpack.c.l.b16 %v1430
    %v1706 = vunpack.c.h.b16 %v1430
    %v1707 = vunpack.c.l.b16 %v1431
    %v1708 = vpack.c.b16 %v1567, %v1564
    %v1709 = vpack.c.b16 %v1568, %v1565
    %v1710 = vpack.c.b16 %v1569, %v1566
    %v1711 = vpack.c.b16 %v1573, %v1570
    %v1712 = vpack.c.b16 %v1574, %v1571
    %v1713 = vpack.c.b16 %v1575, %v1572
    %v1714 = vpack.c.b16 %v1579, %v1576
    %v1715 = vpack.c.b16 %v1580, %v1577
    %v1716 = vpack.c.b16 %v1581, %v1578
    %v1717 = vpack.c.b16 %v1585, %v1582
    %v1718 = vpack.c.b16 %v1586, %v1583
    %v1719 = vpack.c.b16 %v1587, %v1584
    %v1720 = vpack.c.b16 %v1591, %v1588
    %v1721 = vpack.c.b16 %v1592, %v1589
    %v1722 = vpack.c.b16 %v1593, %v1590
    %v1723 = vpack.c.b16 %v1597, %v1594
    %v1724 = vpack.c.b16 %v1598, %v1595
    %v1725 = vpack.c.b16 %v1599, %v1596
    %v1726 = vpack.c.b16 %v1603, %v1600
    %v1727 = vpack.c.b16 %v1604, %v1601
    %v1728 = vpack.c.b16 %v1605, %v1602
    %v1729 = vpack.c.b16 %v1609, %v1606
    %v1730 = vpack.c.b16 %v1610, %v1607
    %v1731 = vpack.c.b16 %v1611, %v1608
    %v1732 = vpack.c.b16 %v1615, %v1612
    %v1733 = vpack.c.b16 %v1616, %v1613
    %v1734 = vpack.c.b16 %v1617, %v1614
    %v1735 = vpack.c.b16 %v1621, %v1618
    %v1736 = vpack.c.b16 %v1622, %v1619
    %v1737 = vpack.c.b16 %v1623, %v1620
    %v1738 = vpack.c.b16 %v1627, %v1624
    %v1739 = vpack.c.b16 %v1628, %v1625
    %v1740 = vpack.c.b16 %v1629, %v1626
    %v1741 = vpack.c.b16 %v1633, %v1630
    %v1742 = vpack.c.b16 %v1634, %v1631
    %v1743 = vpack.c.b16 %v1635, %v1632
    %v1744 = vpack.c.b16 %v1639, %v1636
    %v1745 = vpack.c.b16 %v1640, %v1637
    %v1746 = vpack.c.b16 %v1641, %v1638
    %v1747 = vpack.c.b16 %v1645, %v1642
    %v1748 = vpack.c.b16 %v1646, %v1643
    %v1749 = vpack.c.b16 %v1647, %v1644
    %v1750 = vpack.c.b16 %v1651, %v1648
    %v1751 = vpack.c.b16 %v1652, %v1649
    %v1752 = vpack.c.b16 %v1653, %v1650
    %v1753 = vpack.c.b16 %v1657, %v1654
    %v1754 = vpack.c.b16 %v1658, %v1655
    %v1755 = vpack.c.b16 %v1659, %v1656
    %v1756 = vpack.c.b16 %v1663, %v1660
    %v1757 = vpack.c.b16 %v1664, %v1661
    %v1758 = vpack.c.b16 %v1665, %v1662
    %v1759 = vpack.c.b16 %v1669, %v1666
    %v1760 = vpack.c.b16 %v1670, %v1667
    %v1761 = vpack.c.b16 %v1671, %v1668
    %v1762 = vpack.c.b16 %v1675, %v1672
    %v1763 = vpack.c.b16 %v1676, %v1673
    %v1764 = vpack.c.b16 %v1677, %v1674
    %v1765 = vpack.c.b16 %v1681, %v1678
    %v1766 = vpack.c.b16 %v1682, %v1679
    %v1767 = vpack.c.b16 %v1683, %v1680
    %v1768 = vpack.c.b16 %v1687, %v1684
    %v1769 = vpack.c.b16 %v1688, %v1685
    %v1770 = vpack.c.b16 %v1689, %v1686
    %v1771 = vpack.c.b16 %v1693, %v1690
    %v1772 = vpack.c.b16 %v1694, %v1691
    %v1773 = vpack.c.b16 %v1695, %v1692
    %v1774 = vpack.c.b16 %v1699, %v1696
    %v1775 = vpack.c.b16 %v1700, %v1697
    %v1776 = vpack.c.b16 %v1701, %v1698
    %v1777 = vpack.c.b16 %v1705, %v1702
    %v1778 = vpack.c.b16 %v1706, %v1703
    %v1779 = vpack.c.b16 %v1707, %v1704
    %1852 = vmatprep.subr.bf16.mxu0 %v1709
    %1853 = vmatpush1.bf16.msra.mxu0 %v1708
    %1854 = vmatprep.subr.bf16.mxu0 %v1712
    %1855 = vmatpush1.bf16.msra.mxu0 %v1711
    %1856 = vmatprep.subr.bf16.mxu0 %v1715
    %1857 = vmatpush1.bf16.msra.mxu0 %v1714
    %1858 = vmatprep.subr.bf16.mxu0 %v1718
    %1859 = vmatpush1.bf16.msra.mxu0 %v1717
    %1860 = vmatprep.subr.bf16.mxu0 %v1721
    %1861 = vmatpush1.bf16.msra.mxu0 %v1720
    %1862 = vmatprep.subr.bf16.mxu0 %v1724
    %1863 = vmatpush1.bf16.msra.mxu0 %v1723
    %1864 = vmatprep.subr.bf16.mxu0 %v1727
    %1865 = vmatpush1.bf16.msra.mxu0 %v1726
    %1866 = vmatprep.subr.bf16.mxu0 %v1730
    %1867 = vmatpush1.bf16.msra.mxu0 %v1729
    %1868 = vmatprep.subr.bf16.mxu0 %v1733
    %1869 = vmatpush1.bf16.msra.mxu0 %v1732
    %1870 = vmatprep.subr.bf16.mxu0 %v1736
    %1871 = vmatpush1.bf16.msra.mxu0 %v1735
    %1872 = vmatprep.subr.bf16.mxu0 %v1739
    %1873 = vmatpush1.bf16.msra.mxu0 %v1738
    %1874 = vmatprep.subr.bf16.mxu0 %v1742
    %1875 = vmatpush1.bf16.msra.mxu0 %v1741
    %1876 = vmatprep.subr.bf16.mxu0 %v1745
    %1877 = vmatpush1.bf16.msra.mxu0 %v1744
    %1878 = vmatprep.subr.bf16.mxu0 %v1748
    %1879 = vmatpush1.bf16.msra.mxu0 %v1747
    %1880 = vmatprep.subr.bf16.mxu0 %v1751
    %1881 = vmatpush1.bf16.msra.mxu0 %v1750
    %1882 = vmatprep.subr.bf16.mxu0 %v1754
    %1883 = vmatpush1.bf16.msra.mxu0 %v1753
    %1884 = vmatprep.mubr.bf16.mxu0 %v1433
    %1885 = vmatmul.mubr.bf16.gmra.mrb[0].mxu0 %v1432
    %v1886 = vpop.f32.mrb[0].mxu0
    %v1887 = vadd.f32 0.0, %v1886
    %v1888 = vpop.f32.mrb[0].mxu0
    %v1889 = vadd.f32 0.0, %v1888
    %v1890 = vpop.f32.mrb[0].mxu0
    %v1891 = vadd.f32 0.0, %v1890
    %v1892 = vpop.f32.mrb[0].mxu0
    %v1893 = vadd.f32 0.0, %v1892
    %1894 = vmatprep.mubr.bf16.mxu0 %v1435
    %1895 = vmatmul.mubr.bf16.gmra.mrb[0].mxu0 %v1434
    %v1896 = vpop.f32.mrb[0].mxu0
    %v1897 = vadd.f32 0.0, %v1896
    %v1898 = vpop.f32.mrb[0].mxu0
    %v1899 = vadd.f32 0.0, %v1898
    %v1900 = vpop.f32.mrb[0].mxu0
    %v1901 = vadd.f32 0.0, %v1900
    %v1902 = vpop.f32.mrb[0].mxu0
    %v1903 = vadd.f32 0.0, %v1902
    %1904 = vmatprep.mubr.bf16.mxu0 %v1437
    %1905 = vmatmul.mubr.bf16.gmra.mrb[0].mxu0 %v1436
    %v1906 = vpop.f32.mrb[0].mxu0
    %v1907 = vadd.f32 0.0, %v1906
    %v1908 = vpop.f32.mrb[0].mxu0
    %v1909 = vadd.f32 0.0, %v1908
    %v1910 = vpop.f32.mrb[0].mxu0
    %v1911 = vadd.f32 0.0, %v1910
    %v1912 = vpop.f32.mrb[0].mxu0
    %v1913 = vadd.f32 0.0, %v1912
    %1914 = vmatprep.mubr.bf16.mxu0 %v1439
    %1915 = vmatmul.mubr.bf16.gmra.mrb[0].mxu0 %v1438
    %v1916 = vpop.f32.mrb[0].mxu0
    %v1917 = vadd.f32 0.0, %v1916
    %v1918 = vpop.f32.mrb[0].mxu0
    %v1919 = vadd.f32 0.0, %v1918
    %v1920 = vpop.f32.mrb[0].mxu0
    %v1921 = vadd.f32 0.0, %v1920
    %v1922 = vpop.f32.mrb[0].mxu0
    %v1923 = vadd.f32 0.0, %v1922
    %1924 = vmatprep.mubr.bf16.mxu0 %v1442
    %1925 = vmatmul.mubr.bf16.gmra.mrb[0].mxu0 %v1441
    %v1926 = vpop.f32.mrb[0].mxu0
    %v1927 = vadd.f32 0.0, %v1926
    %v1928 = vpop.f32.mrb[0].mxu0
    %v1929 = vadd.f32 0.0, %v1928
    %v1930 = vpop.f32.mrb[0].mxu0
    %v1931 = vadd.f32 0.0, %v1930
    %v1932 = vpop.f32.mrb[0].mxu0
    %v1933 = vadd.f32 0.0, %v1932
    %1934 = vmatprep.mubr.bf16.mxu0 %v1444
    %1935 = vmatmul.mubr.bf16.gmra.mrb[0].mxu0 %v1443
    %v1936 = vpop.f32.mrb[0].mxu0
    %v1937 = vadd.f32 0.0, %v1936
    %v1938 = vpop.f32.mrb[0].mxu0
    %v1939 = vadd.f32 0.0, %v1938
    %v1940 = vpop.f32.mrb[0].mxu0
    %v1941 = vadd.f32 0.0, %v1940
    %v1942 = vpop.f32.mrb[0].mxu0
    %v1943 = vadd.f32 0.0, %v1942
    %1944 = vmatprep.mubr.bf16.mxu0 %v1446
    %1945 = vmatmul.mubr.bf16.gmra.mrb[0].mxu0 %v1445
    %v1946 = vpop.f32.mrb[0].mxu0
    %v1947 = vadd.f32 0.0, %v1946
    %v1948 = vpop.f32.mrb[0].mxu0
    %v1949 = vadd.f32 0.0, %v1948
    %v1950 = vpop.f32.mrb[0].mxu0
    %v1951 = vadd.f32 0.0, %v1950
    %v1952 = vpop.f32.mrb[0].mxu0
    %v1953 = vadd.f32 0.0, %v1952
    %1954 = vmatprep.mubr.bf16.mxu0 %v1448
    %1955 = vmatmul.mubr.bf16.gmra.mrb[0].mxu0 %v1447
    %v1956 = vpop.f32.mrb[0].mxu0
    %v1957 = vadd.f32 0.0, %v1956
    %v1958 = vpop.f32.mrb[0].mxu0
    %v1959 = vadd.f32 0.0, %v1958
    %v1960 = vpop.f32.mrb[0].mxu0
    %v1961 = vadd.f32 0.0, %v1960
    %v1962 = vpop.f32.mrb[0].mxu0
    %v1963 = vadd.f32 0.0, %v1962
    %1964 = vdwg.mxu0
    %1965 = vmatprep.subr.bf16.mxu0 %v1757
    %1966 = vmatpush1.bf16.msra.mxu0 %v1756
    %1967 = vmatprep.subr.bf16.mxu0 %v1760
    %1968 = vmatpush1.bf16.msra.mxu0 %v1759
    %1969 = vmatprep.subr.bf16.mxu0 %v1763
    %1970 = vmatpush1.bf16.msra.mxu0 %v1762
    %1971 = vmatprep.subr.bf16.mxu0 %v1766
    %1972 = vmatpush1.bf16.msra.mxu0 %v1765
    %1973 = vmatprep.subr.bf16.mxu0 %v1769
    %1974 = vmatpush1.bf16.msra.mxu0 %v1768
    %1975 = vmatprep.subr.bf16.mxu0 %v1772
    %1976 = vmatpush1.bf16.msra.mxu0 %v1771
    %1977 = vmatprep.subr.bf16.mxu0 %v1775
    %1978 = vmatpush1.bf16.msra.mxu0 %v1774
    %1979 = vmatprep.subr.bf16.mxu0 %v1778
    %1980 = vmatpush1.bf16.msra.mxu0 %v1777
    %1981 = vmatprep.subr.bf16.mxu0 0
    %1982 = vmatpush1.bf16.msra.mxu0 0
    %1983 = vmatprep.subr.bf16.mxu0 0
    %1984 = vmatpush1.bf16.msra.mxu0 0
    %1985 = vmatprep.subr.bf16.mxu0 0
    %1986 = vmatpush1.bf16.msra.mxu0 0
    %1987 = vmatprep.subr.bf16.mxu0 0
    %1988 = vmatpush1.bf16.msra.mxu0 0
    %1989 = vmatprep.subr.bf16.mxu0 0
    %1990 = vmatpush1.bf16.msra.mxu0 0
    %1991 = vmatprep.subr.bf16.mxu0 0
    %1992 = vmatpush1.bf16.msra.mxu0 0
    %1993 = vmatprep.subr.bf16.mxu0 0
    %1994 = vmatpush1.bf16.msra.mxu0 0
    %1995 = vmatprep.subr.bf16.mxu0 0
    %1996 = vmatpush1.bf16.msra.mxu0 0
    %1997 = vmatprep.mubr.bf16.mxu0 0
    %1998 = vmatmul.mubr.bf16.gmra.mrb[0].mxu0 %v1434
    %v1999 = vpop.f32.mrb[0].mxu0
    %v2000 = vadd.f32 %v1887, %v1999
    %v2001 = vpop.f32.mrb[0].mxu0
    %v2002 = vadd.f32 %v1889, %v2001
    %v2003 = vpop.f32.mrb[0].mxu0
    %v2004 = vadd.f32 %v1891, %v2003
    %v2005 = vpop.f32.mrb[0].mxu0
    %v2006 = vadd.f32 %v1893, %v2005
    %2007 = vmatprep.mubr.bf16.mxu0 0
    %2008 = vmatmul.mubr.bf16.gmra.mrb[0].mxu0 %v1436
    %v2009 = vpop.f32.mrb[0].mxu0
    %v2010 = vadd.f32 %v1897, %v2009
    %v2011 = vpop.f32.mrb[0].mxu0
    %v2012 = vadd.f32 %v1899, %v2011
    %v2013 = vpop.f32.mrb[0].mxu0
    %v2014 = vadd.f32 %v1901, %v2013
    %v2015 = vpop.f32.mrb[0].mxu0
    %v2016 = vadd.f32 %v1903, %v2015
    %2017 = vmatprep.mubr.bf16.mxu0 0
    %2018 = vmatmul.mubr.bf16.gmra.mrb[0].mxu0 %v1438
    %v2019 = vpop.f32.mrb[0].mxu0
    %v2020 = vadd.f32 %v1907, %v2019
    %v2021 = vpop.f32.mrb[0].mxu0
    %v2022 = vadd.f32 %v1909, %v2021
    %v2023 = vpop.f32.mrb[0].mxu0
    %v2024 = vadd.f32 %v1911, %v2023
    %v2025 = vpop.f32.mrb[0].mxu0
    %v2026 = vadd.f32 %v1913, %v2025
    %2027 = vmatprep.mubr.bf16.mxu0 0
    %2028 = vmatmul.mubr.bf16.gmra.mrb[0].mxu0 %v1440
    %v2029 = vpop.f32.mrb[0].mxu0
    %v2030 = vadd.f32 %v1917, %v2029
    %v2031 = vpop.f32.mrb[0].mxu0
    %v2032 = vadd.f32 %v1919, %v2031
    %v2033 = vpop.f32.mrb[0].mxu0
    %v2034 = vadd.f32 %v1921, %v2033
    %v2035 = vpop.f32.mrb[0].mxu0
    %v2036 = vadd.f32 %v1923, %v2035
    %2037 = vmatprep.mubr.bf16.mxu0 0
    %2038 = vmatmul.mubr.bf16.gmra.mrb[0].mxu0 %v1443
    %v2039 = vpop.f32.mrb[0].mxu0
    %v2040 = vadd.f32 %v1927, %v2039
    %v2041 = vpop.f32.mrb[0].mxu0
    %v2042 = vadd.f32 %v1929, %v2041
    %v2043 = vpop.f32.mrb[0].mxu0
    %v2044 = vadd.f32 %v1931, %v2043
    %v2045 = vpop.f32.mrb[0].mxu0
    %v2046 = vadd.f32 %v1933, %v2045
    %2047 = vmatprep.mubr.bf16.mxu0 0
    %2048 = vmatmul.mubr.bf16.gmra.mrb[0].mxu0 %v1445
    %v2049 = vpop.f32.mrb[0].mxu0
    %v2050 = vadd.f32 %v1937, %v2049
    %v2051 = vpop.f32.mrb[0].mxu0
    %v2052 = vadd.f32 %v1939, %v2051
    %v2053 = vpop.f32.mrb[0].mxu0
    %v2054 = vadd.f32 %v1941, %v2053
    %v2055 = vpop.f32.mrb[0].mxu0
    %v2056 = vadd.f32 %v1943, %v2055
    %2057 = vmatprep.mubr.bf16.mxu0 0
    %2058 = vmatmul.mubr.bf16.gmra.mrb[0].mxu0 %v1447
    %v2059 = vpop.f32.mrb[0].mxu0
    %v2060 = vadd.f32 %v1947, %v2059
    %v2061 = vpop.f32.mrb[0].mxu0
    %v2062 = vadd.f32 %v1949, %v2061
    %v2063 = vpop.f32.mrb[0].mxu0
    %v2064 = vadd.f32 %v1951, %v2063
    %v2065 = vpop.f32.mrb[0].mxu0
    %v2066 = vadd.f32 %v1953, %v2065
    %2067 = vmatprep.mubr.bf16.mxu0 0
    %2068 = vmatmul.mubr.bf16.gmra.mrb[0].mxu0 %v1449
    %v2069 = vpop.f32.mrb[0].mxu0
    %v2070 = vadd.f32 %v1957, %v2069
    %v2071 = vpop.f32.mrb[0].mxu0
    %v2072 = vadd.f32 %v1959, %v2071
    %v2073 = vpop.f32.mrb[0].mxu0
    %v2074 = vadd.f32 %v1961, %v2073
    %v2075 = vpop.f32.mrb[0].mxu0
    %v2076 = vadd.f32 %v1963, %v2075
    %2077 = vdwg.mxu0
    %2078 = vmatprep.subr.bf16.mxu0 0
    %2079 = vmatpush1.bf16.msra.mxu0 %v1710
    %2080 = vmatprep.subr.bf16.mxu0 0
    %2081 = vmatpush1.bf16.msra.mxu0 %v1713
    %2082 = vmatprep.subr.bf16.mxu0 0
    %2083 = vmatpush1.bf16.msra.mxu0 %v1716
    %2084 = vmatprep.subr.bf16.mxu0 0
    %2085 = vmatpush1.bf16.msra.mxu0 %v1719
    %2086 = vmatprep.subr.bf16.mxu0 0
    %2087 = vmatpush1.bf16.msra.mxu0 %v1722
    %2088 = vmatprep.subr.bf16.mxu0 0
    %2089 = vmatpush1.bf16.msra.mxu0 %v1725
    %2090 = vmatprep.subr.bf16.mxu0 0
    %2091 = vmatpush1.bf16.msra.mxu0 %v1728
    %2092 = vmatprep.subr.bf16.mxu0 0
    %2093 = vmatpush1.bf16.msra.mxu0 %v1731
    %2094 = vmatprep.subr.bf16.mxu0 0
    %2095 = vmatpush1.bf16.msra.mxu0 %v1734
    %2096 = vmatprep.subr.bf16.mxu0 0
    %2097 = vmatpush1.bf16.msra.mxu0 %v1737
    %2098 = vmatprep.subr.bf16.mxu0 0
    %2099 = vmatpush1.bf16.msra.mxu0 %v1740
    %2100 = vmatprep.subr.bf16.mxu0 0
    %2101 = vmatpush1.bf16.msra.mxu0 %v1743
    %2102 = vmatprep.subr.bf16.mxu0 0
    %2103 = vmatpush1.bf16.msra.mxu0 %v1746
    %2104 = vmatprep.subr.bf16.mxu0 0
    %2105 = vmatpush1.bf16.msra.mxu0 %v1749
    %2106 = vmatprep.subr.bf16.mxu0 0
    %2107 = vmatpush1.bf16.msra.mxu0 %v1752
    %2108 = vmatprep.subr.bf16.mxu0 0
    %2109 = vmatpush1.bf16.msra.mxu0 %v1755
    %2110 = vmatprep.mubr.bf16.mxu0 %v1433
    %2111 = vmatmul.mubr.bf16.gmra.mrb[0].mxu0 %v1432
    %v2112 = vpop.f32.mrb[0].mxu0
    %v2113 = vadd.f32 0.0, %v2112
    %v2114 = vpop.f32.mrb[0].mxu0
    %v2115 = vpop.f32.mrb[0].mxu0
    %v2116 = vadd.f32 0.0, %v2115
    %v2117 = vpop.f32.mrb[0].mxu0
    %2118 = vmatprep.mubr.bf16.mxu0 %v1435
    %2119 = vmatmul.mubr.bf16.gmra.mrb[0].mxu0 %v1434
    %v2120 = vpop.f32.mrb[0].mxu0
    %v2121 = vadd.f32 0.0, %v2120
    %v2122 = vpop.f32.mrb[0].mxu0
    %v2123 = vpop.f32.mrb[0].mxu0
    %v2124 = vadd.f32 0.0, %v2123
    %v2125 = vpop.f32.mrb[0].mxu0
    %2126 = vmatprep.mubr.bf16.mxu0 %v1437
    %2127 = vmatmul.mubr.bf16.gmra.mrb[0].mxu0 %v1436
    %v2128 = vpop.f32.mrb[0].mxu0
    %v2129 = vadd.f32 0.0, %v2128
    %v2130 = vpop.f32.mrb[0].mxu0
    %v2131 = vpop.f32.mrb[0].mxu0
    %v2132 = vadd.f32 0.0, %v2131
    %v2133 = vpop.f32.mrb[0].mxu0
    %2134 = vmatprep.mubr.bf16.mxu0 %v1439
    %2135 = vmatmul.mubr.bf16.gmra.mrb[0].mxu0 %v1438
    %v2136 = vpop.f32.mrb[0].mxu0
    %v2137 = vadd.f32 0.0, %v2136
    %v2138 = vpop.f32.mrb[0].mxu0
    %v2139 = vpop.f32.mrb[0].mxu0
    %v2140 = vadd.f32 0.0, %v2139
    %v2141 = vpop.f32.mrb[0].mxu0
    %2142 = vmatprep.mubr.bf16.mxu0 %v1442
    %2143 = vmatmul.mubr.bf16.gmra.mrb[0].mxu0 %v1441
    %v2144 = vpop.f32.mrb[0].mxu0
    %v2145 = vadd.f32 0.0, %v2144
    %v2146 = vpop.f32.mrb[0].mxu0
    %v2147 = vpop.f32.mrb[0].mxu0
    %v2148 = vadd.f32 0.0, %v2147
    %v2149 = vpop.f32.mrb[0].mxu0
    %2150 = vmatprep.mubr.bf16.mxu0 %v1444
    %2151 = vmatmul.mubr.bf16.gmra.mrb[0].mxu0 %v1443
    %v2152 = vpop.f32.mrb[0].mxu0
    %v2153 = vadd.f32 0.0, %v2152
    %v2154 = vpop.f32.mrb[0].mxu0
    %v2155 = vpop.f32.mrb[0].mxu0
    %v2156 = vadd.f32 0.0, %v2155
    %v2157 = vpop.f32.mrb[0].mxu0
    %2158 = vmatprep.mubr.bf16.mxu0 %v1446
    %2159 = vmatmul.mubr.bf16.gmra.mrb[0].mxu0 %v1445
    %v2160 = vpop.f32.mrb[0].mxu0
    %v2161 = vadd.f32 0.0, %v2160
    %v2162 = vpop.f32.mrb[0].mxu0
    %v2163 = vpop.f32.mrb[0].mxu0
    %v2164 = vadd.f32 0.0, %v2163
    %v2165 = vpop.f32.mrb[0].mxu0
    %2166 = vmatprep.mubr.bf16.mxu0 %v1448
    %2167 = vmatmul.mubr.bf16.gmra.mrb[0].mxu0 %v1447
    %v2168 = vpop.f32.mrb[0].mxu0
    %v2169 = vadd.f32 0.0, %v2168
    %v2170 = vpop.f32.mrb[0].mxu0
    %v2171 = vpop.f32.mrb[0].mxu0
    %v2172 = vadd.f32 0.0, %v2171
    %v2173 = vpop.f32.mrb[0].mxu0
    %2174 = vdwg.mxu0
    %2175 = vmatprep.subr.bf16.mxu0 0
    %2176 = vmatpush1.bf16.msra.mxu0 %v1758
    %2177 = vmatprep.subr.bf16.mxu0 0
    %2178 = vmatpush1.bf16.msra.mxu0 %v1761
    %2179 = vmatprep.subr.bf16.mxu0 0
    %2180 = vmatpush1.bf16.msra.mxu0 %v1764
    %2181 = vmatprep.subr.bf16.mxu0 0
    %2182 = vmatpush1.bf16.msra.mxu0 %v1767
    %2183 = vmatprep.subr.bf16.mxu0 0
    %2184 = vmatpush1.bf16.msra.mxu0 %v1770
    %2185 = vmatprep.subr.bf16.mxu0 0
    %2186 = vmatpush1.bf16.msra.mxu0 %v1773
    %2187 = vmatprep.subr.bf16.mxu0 0
    %2188 = vmatpush1.bf16.msra.mxu0 %v1776
    %2189 = vmatprep.subr.bf16.mxu0 0
    %2190 = vmatpush1.bf16.msra.mxu0 %v1779
    %2191 = vmatprep.subr.bf16.mxu0 0
    %2192 = vmatpush1.bf16.msra.mxu0 0
    %2193 = vmatprep.subr.bf16.mxu0 0
    %2194 = vmatpush1.bf16.msra.mxu0 0
    %2195 = vmatprep.subr.bf16.mxu0 0
    %2196 = vmatpush1.bf16.msra.mxu0 0
    %2197 = vmatprep.subr.bf16.mxu0 0
    %2198 = vmatpush1.bf16.msra.mxu0 0
    %2199 = vmatprep.subr.bf16.mxu0 0
    %2200 = vmatpush1.bf16.msra.mxu0 0
    %2201 = vmatprep.subr.bf16.mxu0 0
    %2202 = vmatpush1.bf16.msra.mxu0 0
    %2203 = vmatprep.subr.bf16.mxu0 0
    %2204 = vmatpush1.bf16.msra.mxu0 0
    %2205 = vmatprep.subr.bf16.mxu0 0
    %2206 = vmatpush1.bf16.msra.mxu0 0
    %2207 = vmatprep.mubr.bf16.mxu0 0
    %2208 = vmatmul.mubr.bf16.gmra.mrb[0].mxu0 %v1434
    %v2209 = vpop.f32.mrb[0].mxu0
    %v2210 = vadd.f32 %v2113, %v2209
    %v2211 = vpop.f32.mrb[0].mxu0
    %v2212 = vpop.f32.mrb[0].mxu0
    %v2213 = vadd.f32 %v2116, %v2212
    %v2214 = vpop.f32.mrb[0].mxu0
    %2215 = vmatprep.mubr.bf16.mxu0 0
    %2216 = vmatmul.mubr.bf16.gmra.mrb[0].mxu0 %v1436
    %v2217 = vpop.f32.mrb[0].mxu0
    %v2218 = vadd.f32 %v2121, %v2217
    %v2219 = vpop.f32.mrb[0].mxu0
    %v2220 = vpop.f32.mrb[0].mxu0
    %v2221 = vadd.f32 %v2124, %v2220
    %v2222 = vpop.f32.mrb[0].mxu0
    %2223 = vmatprep.mubr.bf16.mxu0 0
    %2224 = vmatmul.mubr.bf16.gmra.mrb[0].mxu0 %v1438
    %v2225 = vpop.f32.mrb[0].mxu0
    %v2226 = vadd.f32 %v2129, %v2225
    %v2227 = vpop.f32.mrb[0].mxu0
    %v2228 = vpop.f32.mrb[0].mxu0
    %v2229 = vadd.f32 %v2132, %v2228
    %v2230 = vpop.f32.mrb[0].mxu0
    %2231 = vmatprep.mubr.bf16.mxu0 0
    %2232 = vmatmul.mubr.bf16.gmra.mrb[0].mxu0 %v1440
    %v2233 = vpop.f32.mrb[0].mxu0
    %v2234 = vadd.f32 %v2137, %v2233
    %v2235 = vpop.f32.mrb[0].mxu0
    %v2236 = vpop.f32.mrb[0].mxu0
    %v2237 = vadd.f32 %v2140, %v2236
    %v2238 = vpop.f32.mrb[0].mxu0
    %2239 = vmatprep.mubr.bf16.mxu0 0
    %2240 = vmatmul.mubr.bf16.gmra.mrb[0].mxu0 %v1443
    %v2241 = vpop.f32.mrb[0].mxu0
    %v2242 = vadd.f32 %v2145, %v2241
    %v2243 = vpop.f32.mrb[0].mxu0
    %v2244 = vpop.f32.mrb[0].mxu0
    %v2245 = vadd.f32 %v2148, %v2244
    %v2246 = vpop.f32.mrb[0].mxu0
    %2247 = vmatprep.mubr.bf16.mxu0 0
    %2248 = vmatmul.mubr.bf16.gmra.mrb[0].mxu0 %v1445
    %v2249 = vpop.f32.mrb[0].mxu0
    %v2250 = vadd.f32 %v2153, %v2249
    %v2251 = vpop.f32.mrb[0].mxu0
    %v2252 = vpop.f32.mrb[0].mxu0
    %v2253 = vadd.f32 %v2156, %v2252
    %v2254 = vpop.f32.mrb[0].mxu0
    %2255 = vmatprep.mubr.bf16.mxu0 0
    %2256 = vmatmul.mubr.bf16.gmra.mrb[0].mxu0 %v1447
    %v2257 = vpop.f32.mrb[0].mxu0
    %v2258 = vadd.f32 %v2161, %v2257
    %v2259 = vpop.f32.mrb[0].mxu0
    %v2260 = vpop.f32.mrb[0].mxu0
    %v2261 = vadd.f32 %v2164, %v2260
    %v2262 = vpop.f32.mrb[0].mxu0
    %2263 = vmatprep.mubr.bf16.mxu0 0
    %2264 = vmatmul.mubr.bf16.gmra.mrb[0].mxu0 %v1449
    %v2265 = vpop.f32.mrb[0].mxu0
    %v2266 = vadd.f32 %v2169, %v2265
    %v2267 = vpop.f32.mrb[0].mxu0
    %v2268 = vpop.f32.mrb[0].mxu0
    %v2269 = vadd.f32 %v2172, %v2268
    %v2270 = vpop.f32.mrb[0].mxu0
    %2271 = vdwg.mxu0
    %v2272 = vrot.slane %v2000, 7
    %v2273 = vrot.slane %v2004, 7
    %v2274 = vrot.slane %v2010, 7
    %v2275 = vrot.slane %v2014, 7
    %v2276 = vrot.slane %v2020, 7
    %v2277 = vrot.slane %v2024, 7
    %v2278 = vrot.slane %v2030, 7
    %v2279 = vrot.slane %v2034, 7
    %v2280 = vrot.slane %v2040, 7
    %v2281 = vrot.slane %v2044, 7
    %v2282 = vrot.slane %v2050, 7
    %v2283 = vrot.slane %v2054, 7
    %v2284 = vrot.slane %v2060, 7
    %v2285 = vrot.slane %v2064, 7
    %v2286 = vrot.slane %v2070, 7
    %v2287 = vrot.slane %v2074, 7
    %v2288 = vmul.f32 %v105, %v2272
    %v2289 = vmul.f32 %v105, %v2273
    %v2290 = vmul.f32 %v105, %v2274
    %v2291 = vmul.f32 %v105, %v2275
    %v2292 = vmul.f32 %v105, %v2276
    %v2293 = vmul.f32 %v105, %v2277
    %v2294 = vmul.f32 %v105, %v2278
    %v2295 = vmul.f32 %v105, %v2279
    %v2296 = vmul.f32 %v105, %v2280
    %v2297 = vmul.f32 %v105, %v2281
    %v2298 = vmul.f32 %v105, %v2282
    %v2299 = vmul.f32 %v105, %v2283
    %v2300 = vmul.f32 %v105, %v2284
    %v2301 = vmul.f32 %v105, %v2285
    %v2302 = vmul.f32 %v105, %v2286
    %v2303 = vmul.f32 %v105, %v2287
    %v2304 = vadd.f32 %v2002, %v2288
    %v2305 = vadd.f32 %v2006, %v2289
    %v2306 = vadd.f32 %v2012, %v2290
    %v2307 = vadd.f32 %v2016, %v2291
    %v2308 = vadd.f32 %v2022, %v2292
    %v2309 = vadd.f32 %v2026, %v2293
    %v2310 = vadd.f32 %v2032, %v2294
    %v2311 = vadd.f32 %v2036, %v2295
    %v2312 = vadd.f32 %v2042, %v2296
    %v2313 = vadd.f32 %v2046, %v2297
    %v2314 = vadd.f32 %v2052, %v2298
    %v2315 = vadd.f32 %v2056, %v2299
    %v2316 = vadd.f32 %v2062, %v2300
    %v2317 = vadd.f32 %v2066, %v2301
    %v2318 = vadd.f32 %v2072, %v2302
    %v2319 = vadd.f32 %v2076, %v2303
    %v2320 = vrot.slane %v2210, 1
    %v2321 = vrot.slane %v2213, 1
    %v2322 = vrot.slane %v2218, 1
    %v2323 = vrot.slane %v2221, 1
    %v2324 = vrot.slane %v2226, 1
    %v2325 = vrot.slane %v2229, 1
    %v2326 = vrot.slane %v2234, 1
    %v2327 = vrot.slane %v2237, 1
    %v2328 = vrot.slane %v2242, 1
    %v2329 = vrot.slane %v2245, 1
    %v2330 = vrot.slane %v2250, 1
    %v2331 = vrot.slane %v2253, 1
    %v2332 = vrot.slane %v2258, 1
    %v2333 = vrot.slane %v2261, 1
    %v2334 = vrot.slane %v2266, 1
    %v2335 = vrot.slane %v2269, 1
    %v2336 = vmul.f32 %v108, %v2320
    %v2337 = vmul.f32 %v108, %v2321
    %v2338 = vmul.f32 %v108, %v2322
    %v2339 = vmul.f32 %v108, %v2323
    %v2340 = vmul.f32 %v108, %v2324
    %v2341 = vmul.f32 %v108, %v2325
    %v2342 = vmul.f32 %v108, %v2326
    %v2343 = vmul.f32 %v108, %v2327
    %v2344 = vmul.f32 %v108, %v2328
    %v2345 = vmul.f32 %v108, %v2329
    %v2346 = vmul.f32 %v108, %v2330
    %v2347 = vmul.f32 %v108, %v2331
    %v2348 = vmul.f32 %v108, %v2332
    %v2349 = vmul.f32 %v108, %v2333
    %v2350 = vmul.f32 %v108, %v2334
    %v2351 = vmul.f32 %v108, %v2335
    %v2352 = vadd.f32 %v2304, %v2336
    %v2353 = vadd.f32 %v2305, %v2337
    %v2354 = vadd.f32 %v2306, %v2338
    %v2355 = vadd.f32 %v2307, %v2339
    %v2356 = vadd.f32 %v2308, %v2340
    %v2357 = vadd.f32 %v2309, %v2341
    %v2358 = vadd.f32 %v2310, %v2342
    %v2359 = vadd.f32 %v2311, %v2343
    %v2360 = vadd.f32 %v2312, %v2344
    %v2361 = vadd.f32 %v2313, %v2345
    %v2362 = vadd.f32 %v2314, %v2346
    %v2363 = vadd.f32 %v2315, %v2347
    %v2364 = vadd.f32 %v2316, %v2348
    %v2365 = vadd.f32 %v2317, %v2349
    %v2366 = vadd.f32 %v2318, %v2350
    %v2367 = vadd.f32 %v2319, %v2351
    %v2368 = vld [vmem:[%s5] sm:$0x1]
    %v2369 = vld [vmem:[%s6] sm:$0x1]
    %v2370 = vadd.f32 %v2352, %v2353
    %v2371 = vadd.f32 %v2370, %v2354
    %v2372 = vadd.f32 %v2371, %v2355
    %v2373 = vadd.f32 %v2372, %v2356
    %v2374 = vadd.f32 %v2373, %v2357
    %v2375 = vadd.f32 %v2374, %v2358
    %v2376 = vadd.f32 %v2375, %v2359
    %v2377 = vadd.f32 %v2376, %v2360
    %v2378 = vadd.f32 %v2377, %v2361
    %v2379 = vadd.f32 %v2378, %v2362
    %v2380 = vadd.f32 %v2379, %v2363
    %v2381 = vadd.f32 %v2380, %v2364
    %v2382 = vadd.f32 %v2381, %v2365
    %v2383 = vadd.f32 %v2382, %v2366
    %v2384 = vadd.f32 %v2383, %v2367
    %v2385 = vrot.slane %v2384, 4
    %v2386 = vadd.f32 %v2384, %v2385
    %v2387 = vrot.slane %v2386, 2
    %v2388 = vadd.f32 %v2386, %v2387
    %v2389 = vrot.slane %v2388, 1
    %v2390 = vadd.f32 %v2388, %v2389
    %v2391 = vmul.f32 %v2390, 0.0078125
    %v2392 = vmul.f32 %v2352, %v2352
    %v2393 = vmul.f32 %v2353, %v2353
    %v2394 = vmul.f32 %v2354, %v2354
    %v2395 = vmul.f32 %v2355, %v2355
    %v2396 = vmul.f32 %v2356, %v2356
    %v2397 = vmul.f32 %v2357, %v2357
    %v2398 = vmul.f32 %v2358, %v2358
    %v2399 = vmul.f32 %v2359, %v2359
    %v2400 = vmul.f32 %v2360, %v2360
    %v2401 = vmul.f32 %v2361, %v2361
    %v2402 = vmul.f32 %v2362, %v2362
    %v2403 = vmul.f32 %v2363, %v2363
    %v2404 = vmul.f32 %v2364, %v2364
    %v2405 = vmul.f32 %v2365, %v2365
    %v2406 = vmul.f32 %v2366, %v2366
    %v2407 = vmul.f32 %v2367, %v2367
    %v2408 = vadd.f32 %v2392, %v2393
    %v2409 = vadd.f32 %v2408, %v2394
    %v2410 = vadd.f32 %v2409, %v2395
    %v2411 = vadd.f32 %v2410, %v2396
    %v2412 = vadd.f32 %v2411, %v2397
    %v2413 = vadd.f32 %v2412, %v2398
    %v2414 = vadd.f32 %v2413, %v2399
    %v2415 = vadd.f32 %v2414, %v2400
    %v2416 = vadd.f32 %v2415, %v2401
    %v2417 = vadd.f32 %v2416, %v2402
    %v2418 = vadd.f32 %v2417, %v2403
    %v2419 = vadd.f32 %v2418, %v2404
    %v2420 = vadd.f32 %v2419, %v2405
    %v2421 = vadd.f32 %v2420, %v2406
    %v2422 = vadd.f32 %v2421, %v2407
    %v2423 = vrot.slane %v2422, 4
    %v2424 = vadd.f32 %v2422, %v2423
    %v2425 = vrot.slane %v2424, 2
    %v2426 = vadd.f32 %v2424, %v2425
    %v2427 = vrot.slane %v2426, 1
    %v2428 = vadd.f32 %v2426, %v2427
    %v2429 = vmul.f32 %v2428, 0.0078125
    %v2430 = vmul.f32 %v2391, %v2391
    %v2431 = vsub.f32 %v2429, %v2430
    %v2432 = vadd.f32 %v2431, 1e-05
    %v2433 = vrsqrt.pop %v2432
    %v2434 = vmul.f32 %v2368, %v2433
    %v2435 = vmul.f32 %v2391, %v2434
    %v2436 = vsub.f32 %v2369, %v2435
    %v2438 = vlaneseq
    %v2439 = vshrl.u32 %v2438, 7
    %v2440 = vsub.s32 0, %v2439
    %v2441 = vrot.slane %v2434, %v2440
    %v2443 = vmul.f32 %v2352, %v2441
    %v2444 = vmul.f32 %v2353, %v2441
    %v2445 = vmul.f32 %v2354, %v2441
    %v2446 = vmul.f32 %v2355, %v2441
    %v2447 = vmul.f32 %v2356, %v2441
    %v2448 = vmul.f32 %v2357, %v2441
    %v2449 = vmul.f32 %v2358, %v2441
    %v2450 = vmul.f32 %v2359, %v2441
    %v2451 = vmul.f32 %v2360, %v2441
    %v2452 = vmul.f32 %v2361, %v2441
    %v2453 = vmul.f32 %v2362, %v2441
    %v2454 = vmul.f32 %v2363, %v2441
    %v2455 = vmul.f32 %v2364, %v2441
    %v2456 = vmul.f32 %v2365, %v2441
    %v2457 = vmul.f32 %v2366, %v2441
    %v2458 = vmul.f32 %v2367, %v2441
    %v2460 = vlaneseq
    %v2461 = vshrl.u32 %v2460, 7
    %v2462 = vsub.s32 0, %v2461
    %v2463 = vrot.slane %v2436, %v2462
    %v2465 = vadd.f32 %v2443, %v2463
    %v2466 = vadd.f32 %v2444, %v2463
    %v2467 = vadd.f32 %v2445, %v2463
    %v2468 = vadd.f32 %v2446, %v2463
    %v2469 = vadd.f32 %v2447, %v2463
    %v2470 = vadd.f32 %v2448, %v2463
    %v2471 = vadd.f32 %v2449, %v2463
    %v2472 = vadd.f32 %v2450, %v2463
    %v2473 = vadd.f32 %v2451, %v2463
    %v2474 = vadd.f32 %v2452, %v2463
    %v2475 = vadd.f32 %v2453, %v2463
    %v2476 = vadd.f32 %v2454, %v2463
    %v2477 = vadd.f32 %v2455, %v2463
    %v2478 = vadd.f32 %v2456, %v2463
    %v2479 = vadd.f32 %v2457, %v2463
    %v2480 = vadd.f32 %v2458, %v2463
    %v2481 = vadd.f32 %v2465, %v69
    %v2482 = vadd.f32 %v2466, %v70
    %v2483 = vadd.f32 %v2467, %v71
    %v2484 = vadd.f32 %v2468, %v72
    %v2485 = vadd.f32 %v2469, %v73
    %v2486 = vadd.f32 %v2470, %v74
    %v2487 = vadd.f32 %v2471, %v75
    %v2488 = vadd.f32 %v2472, %v76
    %v2489 = vadd.f32 %v2473, %v77
    %v2490 = vadd.f32 %v2474, %v78
    %v2491 = vadd.f32 %v2475, %v79
    %v2492 = vadd.f32 %v2476, %v80
    %v2493 = vadd.f32 %v2477, %v81
    %v2494 = vadd.f32 %v2478, %v82
    %v2495 = vadd.f32 %v2479, %v83
    %v2496 = vadd.f32 %v2480, %v84
    %v2497 = vmax.f32 %v2481, 0.0
    %v2498 = vmax.f32 %v2482, 0.0
    %v2499 = vmax.f32 %v2483, 0.0
    %v2500 = vmax.f32 %v2484, 0.0
    %v2501 = vmax.f32 %v2485, 0.0
    %v2502 = vmax.f32 %v2486, 0.0
    %v2503 = vmax.f32 %v2487, 0.0
    %v2504 = vmax.f32 %v2488, 0.0
    %v2505 = vmax.f32 %v2489, 0.0
    %v2506 = vmax.f32 %v2490, 0.0
    %v2507 = vmax.f32 %v2491, 0.0
    %v2508 = vmax.f32 %v2492, 0.0
    %v2509 = vmax.f32 %v2493, 0.0
    %v2510 = vmax.f32 %v2494, 0.0
    %v2511 = vmax.f32 %v2495, 0.0
    %v2512 = vmax.f32 %v2496, 0.0
    %2513 = vst [vmem:[#allocation8] sm:$0xff] %v2497
    %2514 = vst [vmem:[#allocation8 + $0x8] sm:$0xff] %v2498
    %2515 = vst [vmem:[#allocation8 + $0x10] sm:$0xff] %v2499
    %2516 = vst [vmem:[#allocation8 + $0x18] sm:$0xff] %v2500
    %2517 = vst [vmem:[#allocation8 + $0x20] sm:$0xff] %v2501
    %2518 = vst [vmem:[#allocation8 + $0x28] sm:$0xff] %v2502
    %2519 = vst [vmem:[#allocation8 + $0x30] sm:$0xff] %v2503
    %2520 = vst [vmem:[#allocation8 + $0x38] sm:$0xff] %v2504
    %2521 = vst [vmem:[#allocation8 + $0x40] sm:$0xff] %v2505
    %2522 = vst [vmem:[#allocation8 + $0x48] sm:$0xff] %v2506
    %2523 = vst [vmem:[#allocation8 + $0x50] sm:$0xff] %v2507
    %2524 = vst [vmem:[#allocation8 + $0x58] sm:$0xff] %v2508
    %2525 = vst [vmem:[#allocation8 + $0x60] sm:$0xff] %v2509
    %2526 = vst [vmem:[#allocation8 + $0x68] sm:$0xff] %v2510
    %2527 = vst [vmem:[#allocation8 + $0x70] sm:$0xff] %v2511
    %2528 = vst [vmem:[#allocation8 + $0x78] sm:$0xff] %v2512
    // Predicated region
    $region42: #{residual_block_nhwc.1} parent=1 // pred_check
      _
    $region43: #{residual_block_nhwc.1} parent=1 // pred_check_branch
      %2530 = sbr.rel (0) target = $region45
    $region44: #{residual_block_nhwc.1} parent=1 // pred_region
      %s2532 = ssub.s32 2048, 2048
      %2533 = vsyncadd [#allocation4], %s2532
      %s2534 = sshll.u32 [#allocation8], 4
      %s2535 = int_to_ptr.vmem [resolvable:$true] %s2534
      %2540 = dma.vmem_to_hbm [thread:$0]  %s2535, 2048, %s7, [#allocation4], 128, 128, 8
    $region45: #{residual_block_nhwc.1} parent=1 // pred_fallthru
      _
    // Predicated region
    $region46: #{residual_block_nhwc.1} parent=1 // pred_check
      _
    $region47: #{residual_block_nhwc.1} parent=1 // pred_check_branch
      %2542 = sbr.rel (0) target = $region49
    $region48: #{residual_block_nhwc.1} parent=1 // pred_region
      %2543 = dma.done [#allocation4], 2048
    $region49: #{residual_block_nhwc.1} parent=1 // pred_fallthru
      _
    %2544 = vsyncpa [#allocation3], 1
    %2545 = vsyncpa [#allocation6], 1
    %2546 = vsyncpa [#allocation4], 1

</llo_original>
